<compile_context>
chip_gen: v5e
topology: v5e:2x2
jax: 0.10.0
libtpu: 0.0.40
codegen_flags: <defaults>
</compile_context>

<pallas_src>
import functools

import jax
import jax.numpy as jnp
from jax.experimental import pallas as pl
from jax.experimental.pallas import tpu as pltpu

SMOOTH_NR = 1e-5
SMOOTH_DR = 1e-5


# ---------------------------------------------------------------------------
# Hardware query (best effort, safe defaults everywhere)
# ---------------------------------------------------------------------------
def _tpu_params():
    vmem_bytes = 64 * 1024 * 1024          # conservative default (v7x per-TC)
    num_cores = None
    chip_name = ""
    try:
        info = pltpu.get_tpu_info()
        v = getattr(info, "vmem_capacity_bytes", None)
        if v:
            vmem_bytes = int(v)
        for attr in ("num_cores", "core_count", "num_tensorcores",
                     "tensorcore_count"):
            val = getattr(info, attr, None)
            if val is None:
                continue
            try:
                val = int(val)
            except Exception:
                continue
            if val > 0:
                num_cores = val
                break
        chip_name = str(getattr(info, "chip_version", "")).lower()
    except Exception:
        pass
    vmem_bytes = max(32 * 1024 * 1024, min(vmem_bytes, 128 * 1024 * 1024))
    if num_cores is None:
        # Heuristic: v7x exposes 64 MiB VMEM per TensorCore and has 2 TCs/chip;
        # v5e/v6e expose 128 MiB and have 1 TC.
        num_cores = 2 if vmem_bytes <= 64 * 1024 * 1024 else 1
    num_cores = 2 if num_cores >= 2 else 1
    # bf16 EUP exists on v6e/v7x only; enable only when positively identified.
    bf16_eup = ("6" in chip_name) or ("7" in chip_name)
    return vmem_bytes, num_cores, bf16_eup


# ---------------------------------------------------------------------------
# Tile selection
# ---------------------------------------------------------------------------
def _round_up(x, m):
    return -(-x // m) * m


def _cap_rows_from_vmem(B, S, C, logit_bytes, target_bytes, vmem_budget,
                        max_tile_rows):
    """Largest tile_rows (multiple of 8) whose VMEM footprint fits the budget."""
    bsc = B * S * C
    per_row = 128 * (
        2 * bsc * logit_bytes          # double-buffered logits block
        + 2 * B * C * target_bytes     # double-buffered target block
        + 6 * bsc * 4                  # materialized f32 temps (x, e, p, products)
        + 6 * B * S * 4                # m / denom / inv / xt / logZ / ce_vox
        + B * C * 4                    # f32 upcast of the target
    )
    cap = max(8, (vmem_budget // per_row) // 8 * 8)
    return min(cap, max(8, (max_tile_rows // 8) * 8))


def _choose_tiling(num_rows, cap_rows, num_parallel):
    """Returns (tile_rows, num_tiles, padded_rows); num_tiles % num_parallel == 0."""
    cap_rows = max(8, (cap_rows // 8) * 8)
    # 1) exact multiple-of-8 divisors of num_rows -> no padding, no mask
    if num_rows % 8 == 0:
        start = (min(cap_rows, num_rows) // 8) * 8
        for tr in range(start, 7, -8):
            if num_rows % tr == 0:
                nt = num_rows // tr
                if nt % num_parallel == 0:
                    return tr, nt, num_rows
    # 2) pad (+ mask the ragged tail inside the kernel)
    nt = max(_round_up(num_rows, cap_rows) // cap_rows, num_parallel)
    nt = _round_up(nt, num_parallel)
    tr = _round_up(-(-num_rows // nt), 8)
    return tr, nt, tr * nt


# ---------------------------------------------------------------------------
# Kernel
# ---------------------------------------------------------------------------
def _sum_spatial(v):
    # Reduce the (tile_rows, 128) minor dims; two single-axis sums keep the
    # lowering on the best-supported (minor-dim) reduction path.
    return jnp.sum(jnp.sum(v, axis=-1), axis=-1)


def _loss_stats_kernel(logits_ref, target_ref, acc_ref, tsum_ref, ce_ref, *,
                       true_v, tile_rows, tiles_per_chunk, needs_mask,
                       use_bf16_exp):
    """Accumulate per-(batch, branch, class) Dice/CE statistics for one tile.

    logits_ref : (B, S, C, TR, 128)  all deep-supervision branches, one tile
    target_ref : (B, C, TR, 128)     one-hot target, same tile (streamed once)
    acc_ref    : (1, 2, B, S, C)     [intersection, pred_sum] accumulator
    tsum_ref   : (1, B, C)           target-sum accumulator (no S broadcast)
    ce_ref     : (1, B, S)           cross-entropy partial-sum accumulator
    """
    v_idx = pl.program_id(1)

    @pl.when(v_idx == 0)
    def _():
        acc_ref[...] = jnp.zeros_like(acc_ref)
        tsum_ref[...] = jnp.zeros_like(tsum_ref)
        ce_ref[...] = jnp.zeros_like(ce_ref)

    C = logits_ref.shape[2]

    x_raw = logits_ref[...]                          # (B, S, C, TR, 128) native
    x = x_raw.astype(jnp.float32)
    t = target_ref[...].astype(jnp.float32)          # (B, C, TR, 128)
    t_b = t[:, None]                                 # (B, 1, C, TR, 128)

    # --- class softmax: elementwise max/add over C slabs (full-vreg VPU) ---
    if use_bf16_exp and x_raw.dtype == jnp.bfloat16:
        # bf16 EUP path (v6e/v7x): exp at 2x EUP throughput, f32 accumulation.
        m_n = x_raw[:, :, 0:1]
        for c in range(1, C):
            m_n = jnp.maximum(m_n, x_raw[:, :, c:c + 1])
        e = jnp.exp(x_raw - m_n).astype(jnp.float32)   # (B, S, C, TR, 128)
        m = m_n.astype(jnp.float32)                    # (B, S, 1, TR, 128)
    else:
        m = x[:, :, 0:1]
        for c in range(1, C):
            m = jnp.maximum(m, x[:, :, c:c + 1])
        e = jnp.exp(x - m)

    denom = e[:, :, 0:1]
    for c in range(1, C):
        denom = denom + e[:, :, c:c + 1]               # (B, S, 1, TR, 128)
    inv = pl.reciprocal(denom, approx=True)            # EUP: off the VALU
    p = e * inv                                        # softmax probabilities

    # --- cross-entropy via the one-hot identity (no log-softmax array) -----
    #   -sum_c t*log_softmax(x) = (m + log(sum_c e^{x-m})) - sum_c t*x
    xt = x[:, :, 0] * t[:, None, 0]
    for c in range(1, C):
        xt = xt + x[:, :, c] * t[:, None, c]           # (B, S, TR, 128)
    ce_vox = (m[:, :, 0] + jnp.log(denom[:, :, 0])) - xt

    if needs_mask:
        # Ragged tail: zero out contributions of padded voxels.  Target is
        # zero-padded, so intersection / target-sum need no mask.
        row0 = (pl.program_id(0) * tiles_per_chunk + v_idx) * tile_rows
        rows = jax.lax.broadcasted_iota(jnp.int32, (tile_rows, 128), 0)
        lanes = jax.lax.broadcasted_iota(jnp.int32, (tile_rows, 128), 1)
        valid = ((row0 + rows) * 128 + lanes < true_v).astype(jnp.float32)
        p_for_psum = p * valid
        ce_vox = ce_vox * valid
    else:
        p_for_psum = p

    # TODO(synk): a lax.fori_loop over row-chunks carrying vreg accumulators
    # would bound the live f32 intermediates further on v7x's 64 MiB VMEM.
    acc_ref[0, 0] += _sum_spatial(p * t_b)             # intersection (B, S, C)
    acc_ref[0, 1] += _sum_spatial(p_for_psum)          # pred sum     (B, S, C)
    tsum_ref[0] += _sum_spatial(t)                     # target sum   (B, C)
    ce_ref[0] += _sum_spatial(ce_vox)                  # CE partial   (B, S)


# ---------------------------------------------------------------------------
# Wrapper
# ---------------------------------------------------------------------------
@functools.partial(
    jax.jit, static_argnames=("lambda_dice", "lambda_ce", "max_tile_rows"))
def combined_loss_with_deep_supervision(
    outputs, target, deep_supervision_weights,
    lambda_dice=0.5, lambda_ce=0.5, max_tile_rows=4096,
):
    """outputs: (B, S, C, D, H, W) logits, target: (B, C, D, H, W) one-hot."""
    B, S, C, D, H, W = outputs.shape
    V = D * H * W

    vmem_bytes, num_cores, bf16_eup = _tpu_params()
    vmem_limit = (vmem_bytes * 4) // 5       # ~80% of per-core VMEM
    tile_budget = (vmem_bytes * 13) // 20    # ~65%: headroom for compiler temps

    num_rows = -(-V // 128)
    cap_rows = _cap_rows_from_vmem(
        B, S, C,
        jnp.dtype(outputs.dtype).itemsize,
        jnp.dtype(target.dtype).itemsize,
        tile_budget, max_tile_rows)
    tile_rows, num_tiles, rows_pad = _choose_tiling(num_rows, cap_rows, num_cores)
    num_parallel = num_cores if num_tiles % num_cores == 0 else 1
    tiles_per_chunk = num_tiles // num_parallel

    v_pad = rows_pad * 128
    needs_mask = (v_pad != V)

    # Contiguous reshapes only; padding only for ragged / non-128-aligned volumes.
    logits = outputs.reshape(B, S, C, V)
    tgt = target.reshape(B, C, V)
    if v_pad != V:
        # TODO(synk): a BoundedSlice-based ragged tail would avoid this HBM copy.
        logits = jnp.pad(logits, ((0, 0), (0, 0), (0, 0), (0, v_pad - V)))
        tgt = jnp.pad(tgt, ((0, 0), (0, 0), (0, v_pad - V)))
    logits = logits.reshape(B, S, C, rows_pad, 128)
    tgt = tgt.reshape(B, C, rows_pad, 128)

    use_bf16_exp = bool(bf16_eup and logits.dtype == jnp.bfloat16)

    kernel = functools.partial(
        _loss_stats_kernel,
        true_v=V, tile_rows=tile_rows, tiles_per_chunk=tiles_per_chunk,
        needs_mask=needs_mask, use_bf16_exp=use_bf16_exp)

    acc, tsum_p, ce_p = pl.pallas_call(
        kernel,
        out_shape=(
            jax.ShapeDtypeStruct((num_parallel, 2, B, S, C), jnp.float32),
            jax.ShapeDtypeStruct((num_parallel, B, C), jnp.float32),
            jax.ShapeDtypeStruct((num_parallel, B, S), jnp.float32),
        ),
        grid_spec=pltpu.PrefetchScalarGridSpec(
            num_scalar_prefetch=0,
            grid=(num_parallel, tiles_per_chunk),
            in_specs=[
                # logits in native (B, S, C, rows, 128) layout, all branches in
                # one block so the one-hot target is streamed exactly once.
                pl.BlockSpec(
                    (B, S, C, tile_rows, 128),
                    lambda p, v: (0, 0, 0, p * tiles_per_chunk + v, 0)),
                pl.BlockSpec(
                    (B, C, tile_rows, 128),
                    lambda p, v: (0, 0, p * tiles_per_chunk + v, 0)),
            ],
            out_specs=[
                pl.BlockSpec((1, 2, B, S, C), lambda p, v: (p, 0, 0, 0, 0)),
                pl.BlockSpec((1, B, C), lambda p, v: (p, 0, 0)),
                pl.BlockSpec((1, B, S), lambda p, v: (p, 0, 0)),
            ],
        ),
        compiler_params=pltpu.CompilerParams(
            dimension_semantics=("parallel", "arbitrary"),
            vmem_limit_bytes=int(vmem_limit),
        ),
    )(logits, tgt)

    inter = jnp.sum(acc[:, 0], axis=0)                 # (B, S, C)
    psum = jnp.sum(acc[:, 1], axis=0)                  # (B, S, C)
    tsum = jnp.sum(tsum_p, axis=0)                     # (B, C)
    ce_sum = jnp.sum(ce_p, axis=0)                     # (B, S)

    # MONAI DiceLoss(softmax=True, include_background=True), reduction="mean"
    dice_per = 1.0 - (2.0 * inter + SMOOTH_NR) / (psum + tsum[:, None, :] + SMOOTH_DR)
    dice_s = jnp.mean(dice_per, axis=(0, 2))           # (S,)
    # nn.CrossEntropyLoss(), mean over batch * (true) spatial extent
    ce_s = jnp.sum(ce_sum, axis=0) / (B * V)            # (S,)

    loss_s = lambda_dice * dice_s + lambda_ce * ce_s
    return loss_s[0] + jnp.sum(deep_supervision_weights * loss_s[1:])


# ---------------------------------------------------------------------------
# Pure-JAX reference for verification
# ---------------------------------------------------------------------------
def _reference_loss(outputs, target, ds_weights, lambda_dice=0.5, lambda_ce=0.5):
    outs = jnp.transpose(outputs, (1, 0, 2, 3, 4, 5)).astype(jnp.float32)
    tgt = target.astype(jnp.float32)

    def one_branch(x):
        p = jax.nn.softmax(x, axis=1)
        logp = jax.nn.log_softmax(x, axis=1)
        red = (2, 3, 4)
        inter = jnp.sum(p * tgt, axis=red)
        psum = jnp.sum(p, axis=red)
        tsum = jnp.sum(tgt, axis=red)
        dice = jnp.mean(1.0 - (2 * inter + SMOOTH_NR) / (psum + tsum + SMOOTH_DR))
        ce = jnp.mean(jnp.sum(-tgt * logp, axis=1))
        return lambda_dice * dice + lambda_ce * ce

    losses = jnp.stack([one_branch(outs[s]) for s in range(outs.shape[0])])
    return losses[0] + jnp.sum(ds_weights * losses[1:])


if __name__ == "__main__":
    B, S, C, D, H, W = 2, 3, 4, 16, 16, 16   # final output + 2 deep-supervision heads
    key = jax.random.PRNGKey(0)
    k_out, k_lbl = jax.random.split(key)

    outputs = jax.random.normal(k_out, (B, S, C, D, H, W), dtype=jnp.float32)
    labels = jax.random.randint(k_lbl, (B, D, H, W), 0, C)
    target = jnp.transpose(
        jax.nn.one_hot(labels, C, dtype=jnp.float32), (0, 4, 1, 2, 3)
    )  # (B, C, D, H, W) one-hot
    ds_weights = jnp.array([0.5, 0.25], dtype=jnp.float32)

    ref = _reference_loss(outputs, target, ds_weights)

    # default path (large dense tiles)
    total = jax.block_until_ready(
        combined_loss_with_deep_supervision(outputs, target, ds_weights))
    assert jnp.allclose(total, ref, rtol=5e-3, atol=1e-4), (total, ref)

    # multi-tile path: forces several grid steps / accumulator re-use
    total_tiled = jax.block_until_ready(
        combined_loss_with_deep_supervision(outputs, target, ds_weights,
                                            max_tile_rows=8))
    assert jnp.allclose(total_tiled, ref, rtol=5e-3, atol=1e-4), (total_tiled, ref)

    # ragged spatial extent (V not a multiple of 128): pad + in-kernel mask path
    D2, H2, W2 = 5, 6, 7
    out2 = jax.random.normal(k_out, (B, S, C, D2, H2, W2), dtype=jnp.float32)
    lbl2 = jax.random.randint(k_lbl, (B, D2, H2, W2), 0, C)
    tgt2 = jnp.transpose(
        jax.nn.one_hot(lbl2, C, dtype=jnp.float32), (0, 4, 1, 2, 3))
    ref2 = _reference_loss(out2, tgt2, ds_weights)
    total2 = jax.block_until_ready(
        combined_loss_with_deep_supervision(out2, tgt2, ds_weights))
    assert jnp.allclose(total2, ref2, rtol=5e-3, atol=1e-4), (total2, ref2)

    # bf16 logits path (native-dtype streaming; exp stays f32 unless the chip
    # is positively identified as v6e/v7x)
    out_bf = outputs.astype(jnp.bfloat16)
    ref_bf = _reference_loss(out_bf, target, ds_weights)
    total_bf = jax.block_until_ready(
        combined_loss_with_deep_supervision(out_bf, target, ds_weights))
    assert jnp.allclose(total_bf, ref_bf, rtol=3e-2, atol=1e-3), (total_bf, ref_bf)

    print("KERNEL_OK")
</pallas_src>

<mosaic_0001>
module attributes {stable_mosaic.version = 11 : i64} {
  func.func @_loss_stats_kernel(%arg0: i32, %arg1: i32, %arg2: memref<2x3x4x16x128xf32, #tpu.memory_space<vmem>>, %arg3: memref<2x4x16x128xf32, #tpu.memory_space<vmem>>, %arg4: memref<1x2x2x3x4xf32, #tpu.memory_space<vmem>>, %arg5: memref<1x2x4xf32, #tpu.memory_space<vmem>>, %arg6: memref<1x2x3xf32, #tpu.memory_space<vmem>>) attributes {dimension_semantics = [#tpu.dimension_semantics<parallel>, #tpu.dimension_semantics<arbitrary>], iteration_bounds = array<i64: 2, 1>, scalar_prefetch = 0 : i64, scratch_operands = 0 : i64, tpu.core_type = #tpu.core_type<tc>, window_params = [{transform_indices = @transform_0, window_bounds = array<i64: 2, 3, 4, 16, 128>}, {transform_indices = @transform_1, window_bounds = array<i64: 2, 4, 16, 128>}, {transform_indices = @transform_2, window_bounds = array<i64: 1, 2, 2, 3, 4>}, {transform_indices = @transform_3, window_bounds = array<i64: 1, 2, 4>}, {transform_indices = @transform_4, window_bounds = array<i64: 1, 2, 3>}]} {
    %c0_i32 = arith.constant 0 : i32
    %0 = arith.cmpi eq, %arg1, %c0_i32 : i32
    %1 = arith.extui %0 : i1 to i32
    %c0_i32_0 = arith.constant 0 : i32
    %2 = arith.cmpi ne, %1, %c0_i32_0 : i32
    scf.if %2 {
      %cst_47 = arith.constant 0.000000e+00 : f32
      %96 = vector.broadcast %cst_47 : f32 to vector<1x2x2x3x4xf32>
      %c0_48 = arith.constant 0 : index
      %c0_49 = arith.constant 0 : index
      %c0_50 = arith.constant 0 : index
      %c0_51 = arith.constant 0 : index
      %c0_52 = arith.constant 0 : index
      %97 = vector.load %arg4[%c0_48, %c0_49, %c0_50, %c0_51, %c0_52] : memref<1x2x2x3x4xf32, #tpu.memory_space<vmem>>, vector<1x2x2x3x4xf32>
      tpu.vector_store %arg4[%c0_48, %c0_49, %c0_50, %c0_51, %c0_52], %96 {strides = array<i32>} : memref<1x2x2x3x4xf32, #tpu.memory_space<vmem>>, vector<1x2x2x3x4xf32>,
      %cst_53 = arith.constant 0.000000e+00 : f32
      %98 = vector.broadcast %cst_53 : f32 to vector<1x2x4xf32>
      %c0_54 = arith.constant 0 : index
      %c0_55 = arith.constant 0 : index
      %c0_56 = arith.constant 0 : index
      %99 = vector.load %arg5[%c0_54, %c0_55, %c0_56] : memref<1x2x4xf32, #tpu.memory_space<vmem>>, vector<1x2x4xf32>
      tpu.vector_store %arg5[%c0_54, %c0_55, %c0_56], %98 {strides = array<i32>} : memref<1x2x4xf32, #tpu.memory_space<vmem>>, vector<1x2x4xf32>,
      %cst_57 = arith.constant 0.000000e+00 : f32
      %100 = vector.broadcast %cst_57 : f32 to vector<1x2x3xf32>
      %c0_58 = arith.constant 0 : index
      %c0_59 = arith.constant 0 : index
      %c0_60 = arith.constant 0 : index
      %101 = vector.load %arg6[%c0_58, %c0_59, %c0_60] : memref<1x2x3xf32, #tpu.memory_space<vmem>>, vector<1x2x3xf32>
      tpu.vector_store %arg6[%c0_58, %c0_59, %c0_60], %100 {strides = array<i32>} : memref<1x2x3xf32, #tpu.memory_space<vmem>>, vector<1x2x3xf32>,
    } else {
    }
    %c0 = arith.constant 0 : index
    %c0_1 = arith.constant 0 : index
    %c0_2 = arith.constant 0 : index
    %c0_3 = arith.constant 0 : index
    %c0_4 = arith.constant 0 : index
    %3 = vector.load %arg2[%c0, %c0_1, %c0_2, %c0_3, %c0_4] : memref<2x3x4x16x128xf32, #tpu.memory_space<vmem>>, vector<2x3x4x16x128xf32>
    %c0_5 = arith.constant 0 : index
    %c0_6 = arith.constant 0 : index
    %c0_7 = arith.constant 0 : index
    %c0_8 = arith.constant 0 : index
    %4 = vector.load %arg3[%c0_5, %c0_6, %c0_7, %c0_8] : memref<2x4x16x128xf32, #tpu.memory_space<vmem>>, vector<2x4x16x128xf32>
    %5 = vector.shape_cast %4 : vector<2x4x16x128xf32> to vector<2x1x4x16x128xf32>
    %6 = vector.extract_strided_slice %3 {offsets = [0, 0, 0, 0, 0], sizes = [2, 3, 1, 16, 128], strides = [1, 1, 1, 1, 1]} : vector<2x3x4x16x128xf32> to vector<2x3x1x16x128xf32>
    %7 = vector.extract_strided_slice %3 {offsets = [0, 0, 1, 0, 0], sizes = [2, 3, 1, 16, 128], strides = [1, 1, 1, 1, 1]} : vector<2x3x4x16x128xf32> to vector<2x3x1x16x128xf32>
    %8 = arith.maximumf %6, %7 : vector<2x3x1x16x128xf32>
    %9 = vector.extract_strided_slice %3 {offsets = [0, 0, 2, 0, 0], sizes = [2, 3, 1, 16, 128], strides = [1, 1, 1, 1, 1]} : vector<2x3x4x16x128xf32> to vector<2x3x1x16x128xf32>
    %10 = arith.maximumf %8, %9 : vector<2x3x1x16x128xf32>
    %11 = vector.extract_strided_slice %3 {offsets = [0, 0, 3, 0, 0], sizes = [2, 3, 1, 16, 128], strides = [1, 1, 1, 1, 1]} : vector<2x3x4x16x128xf32> to vector<2x3x1x16x128xf32>
    %12 = arith.maximumf %10, %11 : vector<2x3x1x16x128xf32>
    %13 = vector.broadcast %12 : vector<2x3x1x16x128xf32> to vector<2x3x4x16x128xf32>
    %14 = arith.subf %3, %13 : vector<2x3x4x16x128xf32>
    %15 = math.exp %14 : vector<2x3x4x16x128xf32>
    %16 = vector.extract_strided_slice %15 {offsets = [0, 0, 0, 0, 0], sizes = [2, 3, 1, 16, 128], strides = [1, 1, 1, 1, 1]} : vector<2x3x4x16x128xf32> to vector<2x3x1x16x128xf32>
    %17 = vector.extract_strided_slice %15 {offsets = [0, 0, 1, 0, 0], sizes = [2, 3, 1, 16, 128], strides = [1, 1, 1, 1, 1]} : vector<2x3x4x16x128xf32> to vector<2x3x1x16x128xf32>
    %18 = arith.addf %16, %17 : vector<2x3x1x16x128xf32>
    %19 = vector.extract_strided_slice %15 {offsets = [0, 0, 2, 0, 0], sizes = [2, 3, 1, 16, 128], strides = [1, 1, 1, 1, 1]} : vector<2x3x4x16x128xf32> to vector<2x3x1x16x128xf32>
    %20 = arith.addf %18, %19 : vector<2x3x1x16x128xf32>
    %21 = vector.extract_strided_slice %15 {offsets = [0, 0, 3, 0, 0], sizes = [2, 3, 1, 16, 128], strides = [1, 1, 1, 1, 1]} : vector<2x3x4x16x128xf32> to vector<2x3x1x16x128xf32>
    %22 = arith.addf %20, %21 : vector<2x3x1x16x128xf32>
    %23 = tpu.reciprocal %22 {approx = true} : vector<2x3x1x16x128xf32> -> vector<2x3x1x16x128xf32>
    %24 = vector.broadcast %23 : vector<2x3x1x16x128xf32> to vector<2x3x4x16x128xf32>
    %25 = arith.mulf %15, %24 : vector<2x3x4x16x128xf32>
    %26 = vector.extract_strided_slice %3 {offsets = [0, 0, 0, 0, 0], sizes = [2, 3, 1, 16, 128], strides = [1, 1, 1, 1, 1]} : vector<2x3x4x16x128xf32> to vector<2x3x1x16x128xf32>
    %27 = vector.shape_cast %26 : vector<2x3x1x16x128xf32> to vector<2x3x16x128xf32>
    %28 = vector.extract_strided_slice %4 {offsets = [0, 0, 0, 0], sizes = [2, 1, 16, 128], strides = [1, 1, 1, 1]} : vector<2x4x16x128xf32> to vector<2x1x16x128xf32>
    %29 = vector.shape_cast %28 : vector<2x1x16x128xf32> to vector<2x16x128xf32>
    %30 = vector.shape_cast %29 : vector<2x16x128xf32> to vector<2x1x16x128xf32>
    %31 = vector.broadcast %30 : vector<2x1x16x128xf32> to vector<2x3x16x128xf32>
    %32 = arith.mulf %27, %31 : vector<2x3x16x128xf32>
    %33 = vector.extract_strided_slice %3 {offsets = [0, 0, 1, 0, 0], sizes = [2, 3, 1, 16, 128], strides = [1, 1, 1, 1, 1]} : vector<2x3x4x16x128xf32> to vector<2x3x1x16x128xf32>
    %34 = vector.shape_cast %33 : vector<2x3x1x16x128xf32> to vector<2x3x16x128xf32>
    %35 = vector.extract_strided_slice %4 {offsets = [0, 1, 0, 0], sizes = [2, 1, 16, 128], strides = [1, 1, 1, 1]} : vector<2x4x16x128xf32> to vector<2x1x16x128xf32>
    %36 = vector.shape_cast %35 : vector<2x1x16x128xf32> to vector<2x16x128xf32>
    %37 = vector.shape_cast %36 : vector<2x16x128xf32> to vector<2x1x16x128xf32>
    %38 = vector.broadcast %37 : vector<2x1x16x128xf32> to vector<2x3x16x128xf32>
    %39 = arith.mulf %34, %38 : vector<2x3x16x128xf32>
    %40 = arith.addf %32, %39 : vector<2x3x16x128xf32>
    %41 = vector.extract_strided_slice %3 {offsets = [0, 0, 2, 0, 0], sizes = [2, 3, 1, 16, 128], strides = [1, 1, 1, 1, 1]} : vector<2x3x4x16x128xf32> to vector<2x3x1x16x128xf32>
    %42 = vector.shape_cast %41 : vector<2x3x1x16x128xf32> to vector<2x3x16x128xf32>
    %43 = vector.extract_strided_slice %4 {offsets = [0, 2, 0, 0], sizes = [2, 1, 16, 128], strides = [1, 1, 1, 1]} : vector<2x4x16x128xf32> to vector<2x1x16x128xf32>
    %44 = vector.shape_cast %43 : vector<2x1x16x128xf32> to vector<2x16x128xf32>
    %45 = vector.shape_cast %44 : vector<2x16x128xf32> to vector<2x1x16x128xf32>
    %46 = vector.broadcast %45 : vector<2x1x16x128xf32> to vector<2x3x16x128xf32>
    %47 = arith.mulf %42, %46 : vector<2x3x16x128xf32>
    %48 = arith.addf %40, %47 : vector<2x3x16x128xf32>
    %49 = vector.extract_strided_slice %3 {offsets = [0, 0, 3, 0, 0], sizes = [2, 3, 1, 16, 128], strides = [1, 1, 1, 1, 1]} : vector<2x3x4x16x128xf32> to vector<2x3x1x16x128xf32>
    %50 = vector.shape_cast %49 : vector<2x3x1x16x128xf32> to vector<2x3x16x128xf32>
    %51 = vector.extract_strided_slice %4 {offsets = [0, 3, 0, 0], sizes = [2, 1, 16, 128], strides = [1, 1, 1, 1]} : vector<2x4x16x128xf32> to vector<2x1x16x128xf32>
    %52 = vector.shape_cast %51 : vector<2x1x16x128xf32> to vector<2x16x128xf32>
    %53 = vector.shape_cast %52 : vector<2x16x128xf32> to vector<2x1x16x128xf32>
    %54 = vector.broadcast %53 : vector<2x1x16x128xf32> to vector<2x3x16x128xf32>
    %55 = arith.mulf %50, %54 : vector<2x3x16x128xf32>
    %56 = arith.addf %48, %55 : vector<2x3x16x128xf32>
    %57 = vector.shape_cast %12 : vector<2x3x1x16x128xf32> to vector<2x3x16x128xf32>
    %58 = vector.shape_cast %22 : vector<2x3x1x16x128xf32> to vector<2x3x16x128xf32>
    %59 = math.log %58 : vector<2x3x16x128xf32>
    %60 = arith.addf %57, %59 : vector<2x3x16x128xf32>
    %61 = arith.subf %60, %56 : vector<2x3x16x128xf32>
    %c0_9 = arith.constant 0 : index
    %c0_10 = arith.constant 0 : index
    %c0_11 = arith.constant 0 : index
    %c0_12 = arith.constant 0 : index
    %c0_13 = arith.constant 0 : index
    %62 = vector.load %arg4[%c0_9, %c0_10, %c0_11, %c0_12, %c0_13] : memref<1x2x2x3x4xf32, #tpu.memory_space<vmem>>, vector<1x1x2x3x4xf32>
    %63 = vector.shape_cast %62 : vector<1x1x2x3x4xf32> to vector<2x3x4xf32>
    %64 = vector.broadcast %5 : vector<2x1x4x16x128xf32> to vector<2x3x4x16x128xf32>
    %65 = arith.mulf %25, %64 : vector<2x3x4x16x128xf32>
    %cst = arith.constant dense<0.000000e+00> : vector<2x3x4x16xf32>
    %66 = vector.multi_reduction <add>, %65, %cst [4] : vector<2x3x4x16x128xf32> to vector<2x3x4x16xf32>
    %cst_14 = arith.constant dense<0.000000e+00> : vector<2x3x4xf32>
    %67 = vector.multi_reduction <add>, %66, %cst_14 [3] : vector<2x3x4x16xf32> to vector<2x3x4xf32>
    %68 = arith.addf %63, %67 : vector<2x3x4xf32>
    %c0_15 = arith.constant 0 : index
    %c0_16 = arith.constant 0 : index
    %c0_17 = arith.constant 0 : index
    %c0_18 = arith.constant 0 : index
    %c0_19 = arith.constant 0 : index
    %69 = vector.load %arg4[%c0_15, %c0_16, %c0_17, %c0_18, %c0_19] : memref<1x2x2x3x4xf32, #tpu.memory_space<vmem>>, vector<1x1x2x3x4xf32>
    %70 = vector.shape_cast %69 : vector<1x1x2x3x4xf32> to vector<2x3x4xf32>
    %71 = vector.shape_cast %68 : vector<2x3x4xf32> to vector<1x1x2x3x4xf32>
    tpu.vector_store %arg4[%c0_15, %c0_16, %c0_17, %c0_18, %c0_19], %71 {strides = array<i32>} : memref<1x2x2x3x4xf32, #tpu.memory_space<vmem>>, vector<1x1x2x3x4xf32>,
    %c0_20 = arith.constant 0 : index
    %c1 = arith.constant 1 : index
    %c0_21 = arith.constant 0 : index
    %c0_22 = arith.constant 0 : index
    %c0_23 = arith.constant 0 : index
    %72 = vector.load %arg4[%c0_20, %c1, %c0_21, %c0_22, %c0_23] : memref<1x2x2x3x4xf32, #tpu.memory_space<vmem>>, vector<1x1x2x3x4xf32>
    %73 = vector.shape_cast %72 : vector<1x1x2x3x4xf32> to vector<2x3x4xf32>
    %cst_24 = arith.constant dense<0.000000e+00> : vector<2x3x4x16xf32>
    %74 = vector.multi_reduction <add>, %25, %cst_24 [4] : vector<2x3x4x16x128xf32> to vector<2x3x4x16xf32>
    %cst_25 = arith.constant dense<0.000000e+00> : vector<2x3x4xf32>
    %75 = vector.multi_reduction <add>, %74, %cst_25 [3] : vector<2x3x4x16xf32> to vector<2x3x4xf32>
    %76 = arith.addf %73, %75 : vector<2x3x4xf32>
    %c0_26 = arith.constant 0 : index
    %c1_27 = arith.constant 1 : index
    %c0_28 = arith.constant 0 : index
    %c0_29 = arith.constant 0 : index
    %c0_30 = arith.constant 0 : index
    %77 = vector.load %arg4[%c0_26, %c1_27, %c0_28, %c0_29, %c0_30] : memref<1x2x2x3x4xf32, #tpu.memory_space<vmem>>, vector<1x1x2x3x4xf32>
    %78 = vector.shape_cast %77 : vector<1x1x2x3x4xf32> to vector<2x3x4xf32>
    %79 = vector.shape_cast %76 : vector<2x3x4xf32> to vector<1x1x2x3x4xf32>
    tpu.vector_store %arg4[%c0_26, %c1_27, %c0_28, %c0_29, %c0_30], %79 {strides = array<i32>} : memref<1x2x2x3x4xf32, #tpu.memory_space<vmem>>, vector<1x1x2x3x4xf32>,
    %c0_31 = arith.constant 0 : index
    %c0_32 = arith.constant 0 : index
    %c0_33 = arith.constant 0 : index
    %80 = vector.load %arg5[%c0_31, %c0_32, %c0_33] : memref<1x2x4xf32, #tpu.memory_space<vmem>>, vector<1x2x4xf32>
    %81 = vector.shape_cast %80 : vector<1x2x4xf32> to vector<2x4xf32>
    %cst_34 = arith.constant dense<0.000000e+00> : vector<2x4x16xf32>
    %82 = vector.multi_reduction <add>, %4, %cst_34 [3] : vector<2x4x16x128xf32> to vector<2x4x16xf32>
    %cst_35 = arith.constant dense<0.000000e+00> : vector<2x4xf32>
    %83 = vector.multi_reduction <add>, %82, %cst_35 [2] : vector<2x4x16xf32> to vector<2x4xf32>
    %84 = arith.addf %81, %83 : vector<2x4xf32>
    %c0_36 = arith.constant 0 : index
    %c0_37 = arith.constant 0 : index
    %c0_38 = arith.constant 0 : index
    %85 = vector.load %arg5[%c0_36, %c0_37, %c0_38] : memref<1x2x4xf32, #tpu.memory_space<vmem>>, vector<1x2x4xf32>
    %86 = vector.shape_cast %85 : vector<1x2x4xf32> to vector<2x4xf32>
    %87 = vector.shape_cast %84 : vector<2x4xf32> to vector<1x2x4xf32>
    tpu.vector_store %arg5[%c0_36, %c0_37, %c0_38], %87 {strides = array<i32>} : memref<1x2x4xf32, #tpu.memory_space<vmem>>, vector<1x2x4xf32>,
    %c0_39 = arith.constant 0 : index
    %c0_40 = arith.constant 0 : index
    %c0_41 = arith.constant 0 : index
    %88 = vector.load %arg6[%c0_39, %c0_40, %c0_41] : memref<1x2x3xf32, #tpu.memory_space<vmem>>, vector<1x2x3xf32>
    %89 = vector.shape_cast %88 : vector<1x2x3xf32> to vector<2x3xf32>
    %cst_42 = arith.constant dense<0.000000e+00> : vector<2x3x16xf32>
    %90 = vector.multi_reduction <add>, %61, %cst_42 [3] : vector<2x3x16x128xf32> to vector<2x3x16xf32>
    %cst_43 = arith.constant dense<0.000000e+00> : vector<2x3xf32>
    %91 = vector.multi_reduction <add>, %90, %cst_43 [2] : vector<2x3x16xf32> to vector<2x3xf32>
    %92 = arith.addf %89, %91 : vector<2x3xf32>
    %c0_44 = arith.constant 0 : index
    %c0_45 = arith.constant 0 : index
    %c0_46 = arith.constant 0 : index
    %93 = vector.load %arg6[%c0_44, %c0_45, %c0_46] : memref<1x2x3xf32, #tpu.memory_space<vmem>>, vector<1x2x3xf32>
    %94 = vector.shape_cast %93 : vector<1x2x3xf32> to vector<2x3xf32>
    %95 = vector.shape_cast %92 : vector<2x3xf32> to vector<1x2x3xf32>
    tpu.vector_store %arg6[%c0_44, %c0_45, %c0_46], %95 {strides = array<i32>} : memref<1x2x3xf32, #tpu.memory_space<vmem>>, vector<1x2x3xf32>,
    return
  }
  func.func @transform_0(%arg0: i32, %arg1: i32) -> (i32, i32, i32, i32, i32) {
    %c1_i32 = arith.constant 1 : i32
    %0 = arith.muli %arg0, %c1_i32 : i32
    %1 = arith.addi %0, %arg1 : i32
    %c0_i32 = arith.constant 0 : i32
    %c0_i32_0 = arith.constant 0 : i32
    %c0_i32_1 = arith.constant 0 : i32
    %c0_i32_2 = arith.constant 0 : i32
    %c0_i32_3 = arith.constant 0 : i32
    return %c0_i32, %c0_i32_0, %c0_i32_1, %1, %c0_i32_2 : i32, i32, i32, i32, i32
  }
  func.func @transform_1(%arg0: i32, %arg1: i32) -> (i32, i32, i32, i32) {
    %c1_i32 = arith.constant 1 : i32
    %0 = arith.muli %arg0, %c1_i32 : i32
    %1 = arith.addi %0, %arg1 : i32
    %c0_i32 = arith.constant 0 : i32
    %c0_i32_0 = arith.constant 0 : i32
    %c0_i32_1 = arith.constant 0 : i32
    %c0_i32_2 = arith.constant 0 : i32
    return %c0_i32, %c0_i32_0, %1, %c0_i32_1 : i32, i32, i32, i32
  }
  func.func @transform_2(%arg0: i32, %arg1: i32) -> (i32, i32, i32, i32, i32) {
    %c0_i32 = arith.constant 0 : i32
    %c0_i32_0 = arith.constant 0 : i32
    %c0_i32_1 = arith.constant 0 : i32
    %c0_i32_2 = arith.constant 0 : i32
    %c0_i32_3 = arith.constant 0 : i32
    return %arg0, %c0_i32, %c0_i32_0, %c0_i32_1, %c0_i32_2 : i32, i32, i32, i32, i32
  }
  func.func @transform_3(%arg0: i32, %arg1: i32) -> (i32, i32, i32) {
    %c0_i32 = arith.constant 0 : i32
    %c0_i32_0 = arith.constant 0 : i32
    %c0_i32_1 = arith.constant 0 : i32
    return %arg0, %c0_i32, %c0_i32_0 : i32, i32, i32
  }
  func.func @transform_4(%arg0: i32, %arg1: i32) -> (i32, i32, i32) {
    %c0_i32 = arith.constant 0 : i32
    %c0_i32_0 = arith.constant 0 : i32
    %c0_i32_1 = arith.constant 0 : i32
    return %arg0, %c0_i32, %c0_i32_0 : i32, i32, i32
  }
}

</mosaic_0001>

<llo_original>
// kernel: combined_loss_with_deep_supervision.1
$region0: #{combined_loss_with_deep_supervision.1}
  #allocation0 [shape = 'u32[]', space=smem, size = 0x4, offset = 0x4, fixed_abs, tag = 'smem constant byte address 0x4 - core index']
  #allocation1 [shape = 'u32[72,128]{1,0:T(1,128)}', space=vmem, size = 0x9000, scoped, tag = 'internal scratch']
  %s0 = inlined_call_operand.vmem [shape: f32[2,3,4,32,128], index: 0, kind: input, shape index: {}]
  %s1 = inlined_call_operand.vmem [shape: f32[2,4,32,128], index: 1, kind: input, shape index: {}]
  %s2 = inlined_call_operand.vmem [shape: f32[2,2,2,3,4], index: 2, kind: output, shape index: {0}]
  %s3 = inlined_call_operand.vmem [shape: f32[2,2,4], index: 3, kind: output, shape index: {1}]
  %s4 = inlined_call_operand.vmem [shape: f32[2,2,3], index: 4, kind: output, shape index: {2}]
  %5 = xla_tuple %s2, %s3, %s4
  %s6 = sld [smem:[#allocation0]]
  $region137: #{combined_loss_with_deep_supervision.1} parent=0
    _
  %s8 = ssub.s32 1, %s6
  %s9 = scalar_select 0, %s8, %s6
  $region1: #{combined_loss_with_deep_supervision.1} parent=0
    #allocation2 [shape = 'u8[393216]{0}', space=vmem, size = 0x60000, scoped, tag = 'input window, operand 0']
    #allocation3 [shape = 'u8[131072]{0}', space=vmem, size = 0x20000, scoped, tag = 'input window, operand 1']
    loop: start=0, step=1, limit=4
    $region2: #{combined_loss_with_deep_supervision.1} parent=1 // loop_pre_header
      _
    $region3: #{combined_loss_with_deep_supervision.1} parent=1 // loop_header
      %s11 = sphi 0, %s15
      %p12 = scmp.ge.s32.totalorder %s11, 4
      %s18 = sphi 0, %s30
      %s19 = sphi 0, %s26
      %s20 = sphi 0, %s18
      %s21 = sphi 0, %s19
      %s22 = sphi 0, %s20
      %s23 = sphi 0, %s21
      %s35 = sphi 0, %s37
      %s38 = sphi 0, %s35
      %s39 = sphi 0, %s38
      %s55 = sphi 0, %s39
      %s63 = sphi 0, %s65
      %s66 = sphi 0, %s63
      %s67 = sphi 0, %s66
      %s83 = sphi 0, %s67
      %s89 = sphi 0, %s91
      %s92 = sphi 0, %s89
      %s93 = sphi 0, %s92
      %s109 = sphi 0, %s93
      %s115 = sphi 0, %s117
      %s118 = sphi 0, %s115
      %s119 = sphi 0, %s118
      %s135 = sphi 0, %s119
      %s141 = sphi 0, %s143
      %s144 = sphi 0, %s141
      %s145 = sphi 0, %s144
      %s161 = sphi 0, %s145
    $region4: #{combined_loss_with_deep_supervision.1} parent=1 // loop_header_branch
      %14 = sbr.rel (%p12) target = $region8
    $region5: #{combined_loss_with_deep_supervision.1} parent=1 // loop_body
      %s16 = ssub.s32 %s11, 1
      %s17 = ssub.s32 %s11, 2
      %s24 = sadd.s32 1, %s19
      %p25 = scmp.ge.s32.totalorder %s24, 1
      %s26 = scalar_select %p25, 0, %s24
      %s27 = sadd.s32 1, %s18
      %s28 = scalar_select %p25, %s27, %s18
      %p29 = scmp.ge.s32.totalorder %s28, 2
      %s30 = scalar_select %p29, 0, %s28
      %s31 = sadd.s32 %s18, %s19
      %s32 = sadd.s32 %s30, %s26
      %s33 = ssub.s32 %s31, %s32
      %p34 = scmp.eq.s32.totalorder %s33, 0
      %s36 = sadd.s32 %s35, 1
      %s37 = scalar_select %p34, %s35, %s36
      %p40 = pneg %p34
      %p41 = scmp.eq.s32.totalorder %s11, 1
      %p42 = por %p40, %p41
      %p43 = scmp.ne.s32.totalorder %s35, %s38
      %p44 = scmp.eq.s32.totalorder %s11, 0
      %p45 = por %p43, %p44
      %p46 = scmp.ne.s32.totalorder %s35, %s38
      %p47 = scmp.eq.s32.totalorder %s16, 1
      %p48 = por %p46, %p47
      %p49 = scmp.ne.s32.totalorder %s38, %s39
      %p50 = scmp.eq.s32.totalorder %s16, 0
      %p51 = por %p49, %p50
      %p52 = scmp.ne.s32.totalorder %s38, %s39
      %p53 = scmp.eq.s32.totalorder %s17, 1
      %p54 = por %p52, %p53
      %p56 = scmp.ne.s32.totalorder %s39, %s55
      %p57 = scmp.eq.s32.totalorder %s17, 0
      %p58 = por %p56, %p57
      %s59 = sadd.s32 %s18, %s19
      %s60 = sadd.s32 %s30, %s26
      %s61 = ssub.s32 %s59, %s60
      %p62 = scmp.eq.s32.totalorder %s61, 0
      %s64 = sadd.s32 %s63, 1
      %s65 = scalar_select %p62, %s63, %s64
      %p68 = pneg %p62
      %p69 = scmp.eq.s32.totalorder %s11, 1
      %p70 = por %p68, %p69
      %p71 = scmp.ne.s32.totalorder %s63, %s66
      %p72 = scmp.eq.s32.totalorder %s11, 0
      %p73 = por %p71, %p72
      %p74 = scmp.ne.s32.totalorder %s63, %s66
      %p75 = scmp.eq.s32.totalorder %s16, 1
      %p76 = por %p74, %p75
      %p77 = scmp.ne.s32.totalorder %s66, %s67
      %p78 = scmp.eq.s32.totalorder %s16, 0
      %p79 = por %p77, %p78
      %p80 = scmp.ne.s32.totalorder %s66, %s67
      %p81 = scmp.eq.s32.totalorder %s17, 1
      %p82 = por %p80, %p81
      %p84 = scmp.ne.s32.totalorder %s67, %s83
      %p85 = scmp.eq.s32.totalorder %s17, 0
      %p86 = por %p84, %p85
      %s87 = ssub.s32 %s18, %s30
      %p88 = scmp.eq.s32.totalorder %s87, 0
      %s90 = sadd.s32 %s89, 1
      %s91 = scalar_select %p88, %s89, %s90
      %p94 = pneg %p88
      %p95 = scmp.eq.s32.totalorder %s11, 1
      %p96 = por %p94, %p95
      %p97 = scmp.ne.s32.totalorder %s89, %s92
      %p98 = scmp.eq.s32.totalorder %s11, 0
      %p99 = por %p97, %p98
      %p100 = scmp.ne.s32.totalorder %s89, %s92
      %p101 = scmp.eq.s32.totalorder %s16, 1
      %p102 = por %p100, %p101
      %p103 = scmp.ne.s32.totalorder %s92, %s93
      %p104 = scmp.eq.s32.totalorder %s16, 0
      %p105 = por %p103, %p104
      %p106 = scmp.ne.s32.totalorder %s92, %s93
      %p107 = scmp.eq.s32.totalorder %s17, 1
      %p108 = por %p106, %p107
      %p110 = scmp.ne.s32.totalorder %s93, %s109
      %p111 = scmp.eq.s32.totalorder %s17, 0
      %p112 = por %p110, %p111
      %s113 = ssub.s32 %s18, %s30
      %p114 = scmp.eq.s32.totalorder %s113, 0
      %s116 = sadd.s32 %s115, 1
      %s117 = scalar_select %p114, %s115, %s116
      %p120 = pneg %p114
      %p121 = scmp.eq.s32.totalorder %s11, 1
      %p122 = por %p120, %p121
      %p123 = scmp.ne.s32.totalorder %s115, %s118
      %p124 = scmp.eq.s32.totalorder %s11, 0
      %p125 = por %p123, %p124
      %p126 = scmp.ne.s32.totalorder %s115, %s118
      %p127 = scmp.eq.s32.totalorder %s16, 1
      %p128 = por %p126, %p127
      %p129 = scmp.ne.s32.totalorder %s118, %s119
      %p130 = scmp.eq.s32.totalorder %s16, 0
      %p131 = por %p129, %p130
      %p132 = scmp.ne.s32.totalorder %s118, %s119
      %p133 = scmp.eq.s32.totalorder %s17, 1
      %p134 = por %p132, %p133
      %p136 = scmp.ne.s32.totalorder %s119, %s135
      %p137 = scmp.eq.s32.totalorder %s17, 0
      %p138 = por %p136, %p137
      %s139 = ssub.s32 %s18, %s30
      %p140 = scmp.eq.s32.totalorder %s139, 0
      %s142 = sadd.s32 %s141, 1
      %s143 = scalar_select %p140, %s141, %s142
      %p146 = pneg %p140
      %p147 = scmp.eq.s32.totalorder %s11, 1
      %p148 = por %p146, %p147
      %p149 = scmp.ne.s32.totalorder %s141, %s144
      %p150 = scmp.eq.s32.totalorder %s11, 0
      %p151 = por %p149, %p150
      %p152 = scmp.ne.s32.totalorder %s141, %s144
      %p153 = scmp.eq.s32.totalorder %s16, 1
      %p154 = por %p152, %p153
      %p155 = scmp.ne.s32.totalorder %s144, %s145
      %p156 = scmp.eq.s32.totalorder %s16, 0
      %p157 = por %p155, %p156
      %p158 = scmp.ne.s32.totalorder %s144, %s145
      %p159 = scmp.eq.s32.totalorder %s17, 1
      %p160 = por %p158, %p159
      %p162 = scmp.ne.s32.totalorder %s145, %s161
      %p163 = scmp.eq.s32.totalorder %s17, 0
      %p164 = por %p162, %p163
      %p165 = scmp.le.s32.totalorder 1, %s11
      %p166 = scmp.lt.s32.totalorder %s11, 3
      %p167 = pnand %p165, %p166
      %p168 = pneg %p167
      // Predicated region
      $region9: #{combined_loss_with_deep_supervision.1} parent=5 // pred_check
        _
      $region10: #{combined_loss_with_deep_supervision.1} parent=5 // pred_check_branch
        %170 = sbr.rel (%p167) target = $region12
      $region11: #{combined_loss_with_deep_supervision.1} parent=5 // pred_region
        %s171 = ssub.s32 %s11, 1
      $region12: #{combined_loss_with_deep_supervision.1} parent=5 // pred_fallthru
        _
      %p172 = scmp.lt.s32.totalorder %s11, 2
      // Predicated region
      $region13: #{combined_loss_with_deep_supervision.1} parent=5 // pred_check
        %p173 = pneg %p172
      $region14: #{combined_loss_with_deep_supervision.1} parent=5 // pred_check_branch
        %175 = sbr.rel (%p173) target = $region16
      $region15: #{combined_loss_with_deep_supervision.1} parent=5 // pred_region
        // Predicated region
        $region17: #{combined_loss_with_deep_supervision.1} parent=15 // pred_check
          %p176 = pneg %p45
        $region18: #{combined_loss_with_deep_supervision.1} parent=15 // pred_check_branch
          %178 = sbr.rel (%p176) target = $region20
        $region19: #{combined_loss_with_deep_supervision.1} parent=15 // pred_region
          %s179 = sand.u32 %s35, 1
          %s180 = sand.u32 %s35, 1
          %s181 = smul.addr %s180, 384
          %s182 = scalar_lea.vmem [#allocation2], %s181
          %s183 = sadd.s32 %s18, %s19
          %s184 = smul.u32 2, %s183
          %s185 = smul.addr %s184, 8
          %s186 = scalar_lea.vmem %s0, %s185
          // Predicated region
          $region21: #{combined_loss_with_deep_supervision.1} parent=19 // pred_check
            _
          $region22: #{combined_loss_with_deep_supervision.1} parent=19 // pred_check_branch
            %188 = sbr.rel (0) target = $region24
          $region23: #{combined_loss_with_deep_supervision.1} parent=19 // pred_region
            // Predicated region
            $region25: #{combined_loss_with_deep_supervision.1} parent=23 // pred_check
              _
            $region26: #{combined_loss_with_deep_supervision.1} parent=23 // pred_check_branch
              %190 = sbr.rel (0) target = $region28
            $region27: #{combined_loss_with_deep_supervision.1} parent=23 // pred_region
              // Predicated region
              $region40: #{combined_loss_with_deep_supervision.1} parent=27 // pred_check
                _
              $region41: #{combined_loss_with_deep_supervision.1} parent=27 // pred_check_branch
                %300 = sbr.rel (0) target = $region43
              $region42: #{combined_loss_with_deep_supervision.1} parent=27 // pred_region
                loop: start=0, step=1, limit=1
                $region44: #{combined_loss_with_deep_supervision.1} parent=42 // loop_pre_header
                  _
                $region45: #{combined_loss_with_deep_supervision.1} parent=42 // loop_header
                  %s302 = sphi 0, %s306
                  %p303 = scmp.ge.s32.totalorder %s302, 1
                  %s307 = sphi %s186, %s186
                  %s308 = sphi %s182, %s182
                $region46: #{combined_loss_with_deep_supervision.1} parent=42 // loop_header_branch
                  %305 = sbr.rel (%p303) target = $region50
                $region47: #{combined_loss_with_deep_supervision.1} parent=42 // loop_body
                  %v309 = vld [vmem:[%s307] sm:$0xff]
                  %310 = vst [vmem:[%s308] sm:$0xff] %v309
                  %v311 = vld [vmem:[%s307 + $0x8] sm:$0xff]
                  %312 = vst [vmem:[%s308 + $0x8] sm:$0xff] %v311
                  %v313 = vld [vmem:[%s307 + $0x20] sm:$0xff]
                  %314 = vst [vmem:[%s308 + $0x10] sm:$0xff] %v313
                  %v315 = vld [vmem:[%s307 + $0x28] sm:$0xff]
                  %316 = vst [vmem:[%s308 + $0x18] sm:$0xff] %v315
                  %v317 = vld [vmem:[%s307 + $0x40] sm:$0xff]
                  %318 = vst [vmem:[%s308 + $0x20] sm:$0xff] %v317
                  %v319 = vld [vmem:[%s307 + $0x48] sm:$0xff]
                  %320 = vst [vmem:[%s308 + $0x28] sm:$0xff] %v319
                  %v321 = vld [vmem:[%s307 + $0x60] sm:$0xff]
                  %322 = vst [vmem:[%s308 + $0x30] sm:$0xff] %v321
                  %v323 = vld [vmem:[%s307 + $0x68] sm:$0xff]
                  %324 = vst [vmem:[%s308 + $0x38] sm:$0xff] %v323
                  %v325 = vld [vmem:[%s307 + $0x80] sm:$0xff]
                  %326 = vst [vmem:[%s308 + $0x40] sm:$0xff] %v325
                  %v327 = vld [vmem:[%s307 + $0x88] sm:$0xff]
                  %328 = vst [vmem:[%s308 + $0x48] sm:$0xff] %v327
                  %v329 = vld [vmem:[%s307 + $0xa0] sm:$0xff]
                  %330 = vst [vmem:[%s308 + $0x50] sm:$0xff] %v329
                  %v331 = vld [vmem:[%s307 + $0xa8] sm:$0xff]
                  %332 = vst [vmem:[%s308 + $0x58] sm:$0xff] %v331
                  %v333 = vld [vmem:[%s307 + $0xc0] sm:$0xff]
                  %334 = vst [vmem:[%s308 + $0x60] sm:$0xff] %v333
                  %v335 = vld [vmem:[%s307 + $0xc8] sm:$0xff]
                  %336 = vst [vmem:[%s308 + $0x68] sm:$0xff] %v335
                  %v337 = vld [vmem:[%s307 + $0xe0] sm:$0xff]
                  %338 = vst [vmem:[%s308 + $0x70] sm:$0xff] %v337
                  %v339 = vld [vmem:[%s307 + $0xe8] sm:$0xff]
                  %340 = vst [vmem:[%s308 + $0x78] sm:$0xff] %v339
                  %v341 = vld [vmem:[%s307 + $0x100] sm:$0xff]
                  %342 = vst [vmem:[%s308 + $0x80] sm:$0xff] %v341
                  %v343 = vld [vmem:[%s307 + $0x108] sm:$0xff]
                  %344 = vst [vmem:[%s308 + $0x88] sm:$0xff] %v343
                  %v345 = vld [vmem:[%s307 + $0x120] sm:$0xff]
                  %346 = vst [vmem:[%s308 + $0x90] sm:$0xff] %v345
                  %v347 = vld [vmem:[%s307 + $0x128] sm:$0xff]
                  %348 = vst [vmem:[%s308 + $0x98] sm:$0xff] %v347
                  %v349 = vld [vmem:[%s307 + $0x140] sm:$0xff]
                  %350 = vst [vmem:[%s308 + $0xa0] sm:$0xff] %v349
                  %v351 = vld [vmem:[%s307 + $0x148] sm:$0xff]
                  %352 = vst [vmem:[%s308 + $0xa8] sm:$0xff] %v351
                  %v353 = vld [vmem:[%s307 + $0x160] sm:$0xff]
                  %354 = vst [vmem:[%s308 + $0xb0] sm:$0xff] %v353
                  %v355 = vld [vmem:[%s307 + $0x168] sm:$0xff]
                  %356 = vst [vmem:[%s308 + $0xb8] sm:$0xff] %v355
                  %v357 = vld [vmem:[%s307 + $0x180] sm:$0xff]
                  %358 = vst [vmem:[%s308 + $0xc0] sm:$0xff] %v357
                  %v359 = vld [vmem:[%s307 + $0x188] sm:$0xff]
                  %360 = vst [vmem:[%s308 + $0xc8] sm:$0xff] %v359
                  %v361 = vld [vmem:[%s307 + $0x1a0] sm:$0xff]
                  %362 = vst [vmem:[%s308 + $0xd0] sm:$0xff] %v361
                  %v363 = vld [vmem:[%s307 + $0x1a8] sm:$0xff]
                  %364 = vst [vmem:[%s308 + $0xd8] sm:$0xff] %v363
                  %v365 = vld [vmem:[%s307 + $0x1c0] sm:$0xff]
                  %366 = vst [vmem:[%s308 + $0xe0] sm:$0xff] %v365
                  %v367 = vld [vmem:[%s307 + $0x1c8] sm:$0xff]
                  %368 = vst [vmem:[%s308 + $0xe8] sm:$0xff] %v367
                  %v369 = vld [vmem:[%s307 + $0x1e0] sm:$0xff]
                  %370 = vst [vmem:[%s308 + $0xf0] sm:$0xff] %v369
                  %v371 = vld [vmem:[%s307 + $0x1e8] sm:$0xff]
                  %372 = vst [vmem:[%s308 + $0xf8] sm:$0xff] %v371
                  %v373 = vld [vmem:[%s307 + $0x200] sm:$0xff]
                  %374 = vst [vmem:[%s308 + $0x100] sm:$0xff] %v373
                  %v375 = vld [vmem:[%s307 + $0x208] sm:$0xff]
                  %376 = vst [vmem:[%s308 + $0x108] sm:$0xff] %v375
                  %v377 = vld [vmem:[%s307 + $0x220] sm:$0xff]
                  %378 = vst [vmem:[%s308 + $0x110] sm:$0xff] %v377
                  %v379 = vld [vmem:[%s307 + $0x228] sm:$0xff]
                  %380 = vst [vmem:[%s308 + $0x118] sm:$0xff] %v379
                  %v381 = vld [vmem:[%s307 + $0x240] sm:$0xff]
                  %382 = vst [vmem:[%s308 + $0x120] sm:$0xff] %v381
                  %v383 = vld [vmem:[%s307 + $0x248] sm:$0xff]
                  %384 = vst [vmem:[%s308 + $0x128] sm:$0xff] %v383
                  %v385 = vld [vmem:[%s307 + $0x260] sm:$0xff]
                  %386 = vst [vmem:[%s308 + $0x130] sm:$0xff] %v385
                  %v387 = vld [vmem:[%s307 + $0x268] sm:$0xff]
                  %388 = vst [vmem:[%s308 + $0x138] sm:$0xff] %v387
                  %v389 = vld [vmem:[%s307 + $0x280] sm:$0xff]
                  %390 = vst [vmem:[%s308 + $0x140] sm:$0xff] %v389
                  %v391 = vld [vmem:[%s307 + $0x288] sm:$0xff]
                  %392 = vst [vmem:[%s308 + $0x148] sm:$0xff] %v391
                  %v393 = vld [vmem:[%s307 + $0x2a0] sm:$0xff]
                  %394 = vst [vmem:[%s308 + $0x150] sm:$0xff] %v393
                  %v395 = vld [vmem:[%s307 + $0x2a8] sm:$0xff]
                  %396 = vst [vmem:[%s308 + $0x158] sm:$0xff] %v395
                  %v397 = vld [vmem:[%s307 + $0x2c0] sm:$0xff]
                  %398 = vst [vmem:[%s308 + $0x160] sm:$0xff] %v397
                  %v399 = vld [vmem:[%s307 + $0x2c8] sm:$0xff]
                  %400 = vst [vmem:[%s308 + $0x168] sm:$0xff] %v399
                  %v401 = vld [vmem:[%s307 + $0x2e0] sm:$0xff]
                  %402 = vst [vmem:[%s308 + $0x170] sm:$0xff] %v401
                  %v403 = vld [vmem:[%s307 + $0x2e8] sm:$0xff]
                  %404 = vst [vmem:[%s308 + $0x178] sm:$0xff] %v403
                $region48: #{combined_loss_with_deep_supervision.1} parent=42 // loop_footer
                  %s306 = sadd.s32 1, %s302
                $region49: #{combined_loss_with_deep_supervision.1} parent=42 // loop_footer_branch
                  %301 = sbr.rel target = $region45
                $region50: #{combined_loss_with_deep_supervision.1} parent=42 // loop_exit
                  _
              $region43: #{combined_loss_with_deep_supervision.1} parent=27 // pred_fallthru
                _
              // Predicated region
              $region51: #{combined_loss_with_deep_supervision.1} parent=27 // pred_check
                _
              $region52: #{combined_loss_with_deep_supervision.1} parent=27 // pred_check_branch
                %406 = sbr.rel target = $region54
              $region53: #{combined_loss_with_deep_supervision.1} parent=27 // pred_region
                _
              $region54: #{combined_loss_with_deep_supervision.1} parent=27 // pred_fallthru
                _
            $region28: #{combined_loss_with_deep_supervision.1} parent=23 // pred_fallthru
              _
            // Predicated region
            $region29: #{combined_loss_with_deep_supervision.1} parent=23 // pred_check
              _
            $region30: #{combined_loss_with_deep_supervision.1} parent=23 // pred_check_branch
              %192 = sbr.rel target = $region32
            $region31: #{combined_loss_with_deep_supervision.1} parent=23 // pred_region
              %s194 = ssub.s32 256, 1
              loop: start=0, step=1, limit=1
              $region33: #{combined_loss_with_deep_supervision.1} parent=31 // loop_pre_header
                _
              $region34: #{combined_loss_with_deep_supervision.1} parent=31 // loop_header
                %s196 = sphi 0, %s200
                %p197 = scmp.ge.s32.totalorder %s196, 1
                %s201 = sphi %s186, %s186
                %s202 = sphi %s182, %s182
              $region35: #{combined_loss_with_deep_supervision.1} parent=31 // loop_header_branch
                %199 = sbr.rel (%p197) target = $region39
              $region36: #{combined_loss_with_deep_supervision.1} parent=31 // loop_body
                %v203 = vld [vmem:[%s201] sm:%s194]
                %204 = vst [vmem:[%s202] sm:%s194] %v203
                %v205 = vld [vmem:[%s201 + $0x8] sm:%s194]
                %206 = vst [vmem:[%s202 + $0x8] sm:%s194] %v205
                %v207 = vld [vmem:[%s201 + $0x20] sm:%s194]
                %208 = vst [vmem:[%s202 + $0x10] sm:%s194] %v207
                %v209 = vld [vmem:[%s201 + $0x28] sm:%s194]
                %210 = vst [vmem:[%s202 + $0x18] sm:%s194] %v209
                %v211 = vld [vmem:[%s201 + $0x40] sm:%s194]
                %212 = vst [vmem:[%s202 + $0x20] sm:%s194] %v211
                %v213 = vld [vmem:[%s201 + $0x48] sm:%s194]
                %214 = vst [vmem:[%s202 + $0x28] sm:%s194] %v213
                %v215 = vld [vmem:[%s201 + $0x60] sm:%s194]
                %216 = vst [vmem:[%s202 + $0x30] sm:%s194] %v215
                %v217 = vld [vmem:[%s201 + $0x68] sm:%s194]
                %218 = vst [vmem:[%s202 + $0x38] sm:%s194] %v217
                %v219 = vld [vmem:[%s201 + $0x80] sm:%s194]
                %220 = vst [vmem:[%s202 + $0x40] sm:%s194] %v219
                %v221 = vld [vmem:[%s201 + $0x88] sm:%s194]
                %222 = vst [vmem:[%s202 + $0x48] sm:%s194] %v221
                %v223 = vld [vmem:[%s201 + $0xa0] sm:%s194]
                %224 = vst [vmem:[%s202 + $0x50] sm:%s194] %v223
                %v225 = vld [vmem:[%s201 + $0xa8] sm:%s194]
                %226 = vst [vmem:[%s202 + $0x58] sm:%s194] %v225
                %v227 = vld [vmem:[%s201 + $0xc0] sm:%s194]
                %228 = vst [vmem:[%s202 + $0x60] sm:%s194] %v227
                %v229 = vld [vmem:[%s201 + $0xc8] sm:%s194]
                %230 = vst [vmem:[%s202 + $0x68] sm:%s194] %v229
                %v231 = vld [vmem:[%s201 + $0xe0] sm:%s194]
                %232 = vst [vmem:[%s202 + $0x70] sm:%s194] %v231
                %v233 = vld [vmem:[%s201 + $0xe8] sm:%s194]
                %234 = vst [vmem:[%s202 + $0x78] sm:%s194] %v233
                %v235 = vld [vmem:[%s201 + $0x100] sm:%s194]
                %236 = vst [vmem:[%s202 + $0x80] sm:%s194] %v235
                %v237 = vld [vmem:[%s201 + $0x108] sm:%s194]
                %238 = vst [vmem:[%s202 + $0x88] sm:%s194] %v237
                %v239 = vld [vmem:[%s201 + $0x120] sm:%s194]
                %240 = vst [vmem:[%s202 + $0x90] sm:%s194] %v239
                %v241 = vld [vmem:[%s201 + $0x128] sm:%s194]
                %242 = vst [vmem:[%s202 + $0x98] sm:%s194] %v241
                %v243 = vld [vmem:[%s201 + $0x140] sm:%s194]
                %244 = vst [vmem:[%s202 + $0xa0] sm:%s194] %v243
                %v245 = vld [vmem:[%s201 + $0x148] sm:%s194]
                %246 = vst [vmem:[%s202 + $0xa8] sm:%s194] %v245
                %v247 = vld [vmem:[%s201 + $0x160] sm:%s194]
                %248 = vst [vmem:[%s202 + $0xb0] sm:%s194] %v247
                %v249 = vld [vmem:[%s201 + $0x168] sm:%s194]
                %250 = vst [vmem:[%s202 + $0xb8] sm:%s194] %v249
                %v251 = vld [vmem:[%s201 + $0x180] sm:%s194]
                %252 = vst [vmem:[%s202 + $0xc0] sm:%s194] %v251
                %v253 = vld [vmem:[%s201 + $0x188] sm:%s194]
                %254 = vst [vmem:[%s202 + $0xc8] sm:%s194] %v253
                %v255 = vld [vmem:[%s201 + $0x1a0] sm:%s194]
                %256 = vst [vmem:[%s202 + $0xd0] sm:%s194] %v255
                %v257 = vld [vmem:[%s201 + $0x1a8] sm:%s194]
                %258 = vst [vmem:[%s202 + $0xd8] sm:%s194] %v257
                %v259 = vld [vmem:[%s201 + $0x1c0] sm:%s194]
                %260 = vst [vmem:[%s202 + $0xe0] sm:%s194] %v259
                %v261 = vld [vmem:[%s201 + $0x1c8] sm:%s194]
                %262 = vst [vmem:[%s202 + $0xe8] sm:%s194] %v261
                %v263 = vld [vmem:[%s201 + $0x1e0] sm:%s194]
                %264 = vst [vmem:[%s202 + $0xf0] sm:%s194] %v263
                %v265 = vld [vmem:[%s201 + $0x1e8] sm:%s194]
                %266 = vst [vmem:[%s202 + $0xf8] sm:%s194] %v265
                %v267 = vld [vmem:[%s201 + $0x200] sm:%s194]
                %268 = vst [vmem:[%s202 + $0x100] sm:%s194] %v267
                %v269 = vld [vmem:[%s201 + $0x208] sm:%s194]
                %270 = vst [vmem:[%s202 + $0x108] sm:%s194] %v269
                %v271 = vld [vmem:[%s201 + $0x220] sm:%s194]
                %272 = vst [vmem:[%s202 + $0x110] sm:%s194] %v271
                %v273 = vld [vmem:[%s201 + $0x228] sm:%s194]
                %274 = vst [vmem:[%s202 + $0x118] sm:%s194] %v273
                %v275 = vld [vmem:[%s201 + $0x240] sm:%s194]
                %276 = vst [vmem:[%s202 + $0x120] sm:%s194] %v275
                %v277 = vld [vmem:[%s201 + $0x248] sm:%s194]
                %278 = vst [vmem:[%s202 + $0x128] sm:%s194] %v277
                %v279 = vld [vmem:[%s201 + $0x260] sm:%s194]
                %280 = vst [vmem:[%s202 + $0x130] sm:%s194] %v279
                %v281 = vld [vmem:[%s201 + $0x268] sm:%s194]
                %282 = vst [vmem:[%s202 + $0x138] sm:%s194] %v281
                %v283 = vld [vmem:[%s201 + $0x280] sm:%s194]
                %284 = vst [vmem:[%s202 + $0x140] sm:%s194] %v283
                %v285 = vld [vmem:[%s201 + $0x288] sm:%s194]
                %286 = vst [vmem:[%s202 + $0x148] sm:%s194] %v285
                %v287 = vld [vmem:[%s201 + $0x2a0] sm:%s194]
                %288 = vst [vmem:[%s202 + $0x150] sm:%s194] %v287
                %v289 = vld [vmem:[%s201 + $0x2a8] sm:%s194]
                %290 = vst [vmem:[%s202 + $0x158] sm:%s194] %v289
                %v291 = vld [vmem:[%s201 + $0x2c0] sm:%s194]
                %292 = vst [vmem:[%s202 + $0x160] sm:%s194] %v291
                %v293 = vld [vmem:[%s201 + $0x2c8] sm:%s194]
                %294 = vst [vmem:[%s202 + $0x168] sm:%s194] %v293
                %v295 = vld [vmem:[%s201 + $0x2e0] sm:%s194]
                %296 = vst [vmem:[%s202 + $0x170] sm:%s194] %v295
                %v297 = vld [vmem:[%s201 + $0x2e8] sm:%s194]
                %298 = vst [vmem:[%s202 + $0x178] sm:%s194] %v297
              $region37: #{combined_loss_with_deep_supervision.1} parent=31 // loop_footer
                %s200 = sadd.s32 1, %s196
              $region38: #{combined_loss_with_deep_supervision.1} parent=31 // loop_footer_branch
                %195 = sbr.rel target = $region34
              $region39: #{combined_loss_with_deep_supervision.1} parent=31 // loop_exit
                _
            $region32: #{combined_loss_with_deep_supervision.1} parent=23 // pred_fallthru
              _
          $region24: #{combined_loss_with_deep_supervision.1} parent=19 // pred_fallthru
            _
          %407 = vnop
        $region20: #{combined_loss_with_deep_supervision.1} parent=15 // pred_fallthru
          _
        // Predicated region
        $region55: #{combined_loss_with_deep_supervision.1} parent=15 // pred_check
          %p408 = pneg %p73
        $region56: #{combined_loss_with_deep_supervision.1} parent=15 // pred_check_branch
          %410 = sbr.rel (%p408) target = $region58
        $region57: #{combined_loss_with_deep_supervision.1} parent=15 // pred_region
          %s411 = sand.u32 %s63, 1
          %s412 = sand.u32 %s63, 1
          %s413 = smul.addr %s412, 128
          %s414 = scalar_lea.vmem [#allocation3], %s413
          %s415 = sadd.s32 %s18, %s19
          %s416 = smul.u32 2, %s415
          %s417 = smul.addr %s416, 8
          %s418 = scalar_lea.vmem %s1, %s417
          // Predicated region
          $region59: #{combined_loss_with_deep_supervision.1} parent=57 // pred_check
            _
          $region60: #{combined_loss_with_deep_supervision.1} parent=57 // pred_check_branch
            %420 = sbr.rel (0) target = $region62
          $region61: #{combined_loss_with_deep_supervision.1} parent=57 // pred_region
            // Predicated region
            $region63: #{combined_loss_with_deep_supervision.1} parent=61 // pred_check
              _
            $region64: #{combined_loss_with_deep_supervision.1} parent=61 // pred_check_branch
              %422 = sbr.rel (0) target = $region66
            $region65: #{combined_loss_with_deep_supervision.1} parent=61 // pred_region
              // Predicated region
              $region78: #{combined_loss_with_deep_supervision.1} parent=65 // pred_check
                _
              $region79: #{combined_loss_with_deep_supervision.1} parent=65 // pred_check_branch
                %468 = sbr.rel (0) target = $region81
              $region80: #{combined_loss_with_deep_supervision.1} parent=65 // pred_region
                loop: start=0, step=1, limit=1
                $region82: #{combined_loss_with_deep_supervision.1} parent=80 // loop_pre_header
                  _
                $region83: #{combined_loss_with_deep_supervision.1} parent=80 // loop_header
                  %s470 = sphi 0, %s474
                  %p471 = scmp.ge.s32.totalorder %s470, 1
                  %s475 = sphi %s418, %s418
                  %s476 = sphi %s414, %s414
                $region84: #{combined_loss_with_deep_supervision.1} parent=80 // loop_header_branch
                  %473 = sbr.rel (%p471) target = $region88
                $region85: #{combined_loss_with_deep_supervision.1} parent=80 // loop_body
                  %v477 = vld [vmem:[%s475] sm:$0xff]
                  %478 = vst [vmem:[%s476] sm:$0xff] %v477
                  %v479 = vld [vmem:[%s475 + $0x8] sm:$0xff]
                  %480 = vst [vmem:[%s476 + $0x8] sm:$0xff] %v479
                  %v481 = vld [vmem:[%s475 + $0x20] sm:$0xff]
                  %482 = vst [vmem:[%s476 + $0x10] sm:$0xff] %v481
                  %v483 = vld [vmem:[%s475 + $0x28] sm:$0xff]
                  %484 = vst [vmem:[%s476 + $0x18] sm:$0xff] %v483
                  %v485 = vld [vmem:[%s475 + $0x40] sm:$0xff]
                  %486 = vst [vmem:[%s476 + $0x20] sm:$0xff] %v485
                  %v487 = vld [vmem:[%s475 + $0x48] sm:$0xff]
                  %488 = vst [vmem:[%s476 + $0x28] sm:$0xff] %v487
                  %v489 = vld [vmem:[%s475 + $0x60] sm:$0xff]
                  %490 = vst [vmem:[%s476 + $0x30] sm:$0xff] %v489
                  %v491 = vld [vmem:[%s475 + $0x68] sm:$0xff]
                  %492 = vst [vmem:[%s476 + $0x38] sm:$0xff] %v491
                  %v493 = vld [vmem:[%s475 + $0x80] sm:$0xff]
                  %494 = vst [vmem:[%s476 + $0x40] sm:$0xff] %v493
                  %v495 = vld [vmem:[%s475 + $0x88] sm:$0xff]
                  %496 = vst [vmem:[%s476 + $0x48] sm:$0xff] %v495
                  %v497 = vld [vmem:[%s475 + $0xa0] sm:$0xff]
                  %498 = vst [vmem:[%s476 + $0x50] sm:$0xff] %v497
                  %v499 = vld [vmem:[%s475 + $0xa8] sm:$0xff]
                  %500 = vst [vmem:[%s476 + $0x58] sm:$0xff] %v499
                  %v501 = vld [vmem:[%s475 + $0xc0] sm:$0xff]
                  %502 = vst [vmem:[%s476 + $0x60] sm:$0xff] %v501
                  %v503 = vld [vmem:[%s475 + $0xc8] sm:$0xff]
                  %504 = vst [vmem:[%s476 + $0x68] sm:$0xff] %v503
                  %v505 = vld [vmem:[%s475 + $0xe0] sm:$0xff]
                  %506 = vst [vmem:[%s476 + $0x70] sm:$0xff] %v505
                  %v507 = vld [vmem:[%s475 + $0xe8] sm:$0xff]
                  %508 = vst [vmem:[%s476 + $0x78] sm:$0xff] %v507
                $region86: #{combined_loss_with_deep_supervision.1} parent=80 // loop_footer
                  %s474 = sadd.s32 1, %s470
                $region87: #{combined_loss_with_deep_supervision.1} parent=80 // loop_footer_branch
                  %469 = sbr.rel target = $region83
                $region88: #{combined_loss_with_deep_supervision.1} parent=80 // loop_exit
                  _
              $region81: #{combined_loss_with_deep_supervision.1} parent=65 // pred_fallthru
                _
              // Predicated region
              $region89: #{combined_loss_with_deep_supervision.1} parent=65 // pred_check
                _
              $region90: #{combined_loss_with_deep_supervision.1} parent=65 // pred_check_branch
                %510 = sbr.rel target = $region92
              $region91: #{combined_loss_with_deep_supervision.1} parent=65 // pred_region
                _
              $region92: #{combined_loss_with_deep_supervision.1} parent=65 // pred_fallthru
                _
            $region66: #{combined_loss_with_deep_supervision.1} parent=61 // pred_fallthru
              _
            // Predicated region
            $region67: #{combined_loss_with_deep_supervision.1} parent=61 // pred_check
              _
            $region68: #{combined_loss_with_deep_supervision.1} parent=61 // pred_check_branch
              %424 = sbr.rel target = $region70
            $region69: #{combined_loss_with_deep_supervision.1} parent=61 // pred_region
              %s426 = ssub.s32 256, 1
              loop: start=0, step=1, limit=1
              $region71: #{combined_loss_with_deep_supervision.1} parent=69 // loop_pre_header
                _
              $region72: #{combined_loss_with_deep_supervision.1} parent=69 // loop_header
                %s428 = sphi 0, %s432
                %p429 = scmp.ge.s32.totalorder %s428, 1
                %s433 = sphi %s418, %s418
                %s434 = sphi %s414, %s414
              $region73: #{combined_loss_with_deep_supervision.1} parent=69 // loop_header_branch
                %431 = sbr.rel (%p429) target = $region77
              $region74: #{combined_loss_with_deep_supervision.1} parent=69 // loop_body
                %v435 = vld [vmem:[%s433] sm:%s426]
                %436 = vst [vmem:[%s434] sm:%s426] %v435
                %v437 = vld [vmem:[%s433 + $0x8] sm:%s426]
                %438 = vst [vmem:[%s434 + $0x8] sm:%s426] %v437
                %v439 = vld [vmem:[%s433 + $0x20] sm:%s426]
                %440 = vst [vmem:[%s434 + $0x10] sm:%s426] %v439
                %v441 = vld [vmem:[%s433 + $0x28] sm:%s426]
                %442 = vst [vmem:[%s434 + $0x18] sm:%s426] %v441
                %v443 = vld [vmem:[%s433 + $0x40] sm:%s426]
                %444 = vst [vmem:[%s434 + $0x20] sm:%s426] %v443
                %v445 = vld [vmem:[%s433 + $0x48] sm:%s426]
                %446 = vst [vmem:[%s434 + $0x28] sm:%s426] %v445
                %v447 = vld [vmem:[%s433 + $0x60] sm:%s426]
                %448 = vst [vmem:[%s434 + $0x30] sm:%s426] %v447
                %v449 = vld [vmem:[%s433 + $0x68] sm:%s426]
                %450 = vst [vmem:[%s434 + $0x38] sm:%s426] %v449
                %v451 = vld [vmem:[%s433 + $0x80] sm:%s426]
                %452 = vst [vmem:[%s434 + $0x40] sm:%s426] %v451
                %v453 = vld [vmem:[%s433 + $0x88] sm:%s426]
                %454 = vst [vmem:[%s434 + $0x48] sm:%s426] %v453
                %v455 = vld [vmem:[%s433 + $0xa0] sm:%s426]
                %456 = vst [vmem:[%s434 + $0x50] sm:%s426] %v455
                %v457 = vld [vmem:[%s433 + $0xa8] sm:%s426]
                %458 = vst [vmem:[%s434 + $0x58] sm:%s426] %v457
                %v459 = vld [vmem:[%s433 + $0xc0] sm:%s426]
                %460 = vst [vmem:[%s434 + $0x60] sm:%s426] %v459
                %v461 = vld [vmem:[%s433 + $0xc8] sm:%s426]
                %462 = vst [vmem:[%s434 + $0x68] sm:%s426] %v461
                %v463 = vld [vmem:[%s433 + $0xe0] sm:%s426]
                %464 = vst [vmem:[%s434 + $0x70] sm:%s426] %v463
                %v465 = vld [vmem:[%s433 + $0xe8] sm:%s426]
                %466 = vst [vmem:[%s434 + $0x78] sm:%s426] %v465
              $region75: #{combined_loss_with_deep_supervision.1} parent=69 // loop_footer
                %s432 = sadd.s32 1, %s428
              $region76: #{combined_loss_with_deep_supervision.1} parent=69 // loop_footer_branch
                %427 = sbr.rel target = $region72
              $region77: #{combined_loss_with_deep_supervision.1} parent=69 // loop_exit
                _
            $region70: #{combined_loss_with_deep_supervision.1} parent=61 // pred_fallthru
              _
          $region62: #{combined_loss_with_deep_supervision.1} parent=57 // pred_fallthru
            _
          %511 = vnop
        $region58: #{combined_loss_with_deep_supervision.1} parent=15 // pred_fallthru
          _
      $region16: #{combined_loss_with_deep_supervision.1} parent=5 // pred_fallthru
        _
      %p512 = scmp.le.s32.totalorder 1, %s11
      %p513 = scmp.lt.s32.totalorder %s11, 3
      %p514 = pnand %p512, %p513
      %p515 = pneg %p514
      // Predicated region
      $region93: #{combined_loss_with_deep_supervision.1} parent=5 // pred_check
        _
      $region94: #{combined_loss_with_deep_supervision.1} parent=5 // pred_check_branch
        %517 = sbr.rel (%p514) target = $region96
      $region95: #{combined_loss_with_deep_supervision.1} parent=5 // pred_region
        %s518 = ssub.s32 %s11, 1
        %s519 = sand.u32 %s38, 1
        %s520 = sand.u32 %s38, 1
        %s521 = smul.addr %s520, 384
        %s522 = scalar_lea.vmem [#allocation2], %s521
        // Predicated region
        $region97: #{combined_loss_with_deep_supervision.1} parent=95 // pred_check
          %p523 = pneg %p51
        $region98: #{combined_loss_with_deep_supervision.1} parent=95 // pred_check_branch
          %525 = sbr.rel (%p523) target = $region100
        $region99: #{combined_loss_with_deep_supervision.1} parent=95 // pred_region
          _
        $region100: #{combined_loss_with_deep_supervision.1} parent=95 // pred_fallthru
          _
        %s526 = sand.u32 %s66, 1
        %s527 = sand.u32 %s66, 1
        %s528 = smul.addr %s527, 128
        %s529 = scalar_lea.vmem [#allocation3], %s528
        // Predicated region
        $region101: #{combined_loss_with_deep_supervision.1} parent=95 // pred_check
          %p530 = pneg %p79
        $region102: #{combined_loss_with_deep_supervision.1} parent=95 // pred_check_branch
          %532 = sbr.rel (%p530) target = $region104
        $region103: #{combined_loss_with_deep_supervision.1} parent=95 // pred_region
          _
        $region104: #{combined_loss_with_deep_supervision.1} parent=95 // pred_fallthru
          _
        %s533 = sand.u32 %s38, 1
        %s534 = sand.u32 %s38, 1
        %s535 = smul.addr %s534, 384
        %s536 = scalar_lea.vmem [#allocation2], %s535
        %p537 = pneg %p51
        %p538 = pneg %p48
        %s539 = sand.u32 %s66, 1
        %s540 = sand.u32 %s66, 1
        %s541 = smul.addr %s540, 128
        %s542 = scalar_lea.vmem [#allocation3], %s541
        %p543 = pneg %p79
        %p544 = pneg %p76
        %p545 = pneg %p105
        %p546 = pneg %p102
        %p547 = scmp.lt.s32.totalorder %s20, 1
        %s548 = scalar_select %p547, %s20, 1
        %s549 = smul.addr %s548, 4
        %s550 = smul.addr %s549, 4
        %s551 = scalar_lea.vmem %s2, %s550
        %p552 = pneg %p131
        %p553 = pneg %p128
        %p554 = scmp.lt.s32.totalorder %s20, 1
        %s555 = scalar_select %p554, %s20, 1
        %s556 = smul.addr %s555, 2
        %s557 = scalar_lea.vmem %s3, %s556
        %p558 = pneg %p157
        %p559 = pneg %p154
        %p560 = scmp.lt.s32.totalorder %s20, 1
        %s561 = scalar_select %p560, %s20, 1
        %s562 = smul.addr %s561, 2
        %s563 = scalar_lea.vmem %s4, %s562
        %s564 = sadd.s32 %s20, %s21
        %s565 = smul.u32 2, %s564
        %s566 = sadd.s32 %s20, %s21
        %s567 = smul.u32 2, %s566
        %p568 = scmp.lt.s32.totalorder %s20, 1
        %s569 = scalar_select %p568, %s20, 1
        %s570 = smul.addr %s569, 4
        %s571 = smul.addr %s570, 4
        %s572 = scalar_lea.vmem %s2, %s571
        %p573 = scmp.lt.s32.totalorder %s20, 1
        %s574 = scalar_select %p573, %s20, 1
        %s575 = smul.addr %s574, 2
        %s576 = scalar_lea.vmem %s3, %s575
        %p577 = scmp.lt.s32.totalorder %s20, 1
        %s578 = scalar_select %p577, %s20, 1
        %s579 = smul.addr %s578, 2
        %s580 = scalar_lea.vmem %s4, %s579
        %p581 = scmp.eq.s32.totalorder %s21, 0
        // Predicated region
        $region105: #{combined_loss_with_deep_supervision.1} parent=95 // pred_check
          %p582 = pneg %p581
        $region106: #{combined_loss_with_deep_supervision.1} parent=95 // pred_check_branch
          %584 = sbr.rel (%p582) target = $region108
        $region107: #{combined_loss_with_deep_supervision.1} parent=95 // pred_region
          %vm585 = vcmask 26624
          %586 = vst.msk [vmem:[%s572] sm:$0x7] %vm585, 0.0
          %587 = vst.msk [vmem:[%s572 + $0x4] sm:$0x7] %vm585, 0.0
          %588 = vst.msk [vmem:[%s572 + $0x8] sm:$0x7] %vm585, 0.0
          %589 = vst.msk [vmem:[%s572 + $0xc] sm:$0x7] %vm585, 0.0
          %vm590 = vcmask 25600
          %591 = vst.msk [vmem:[%s576] sm:$0x3] %vm590, 0.0
          %vm592 = vcmask 17408
          %593 = vst.msk [vmem:[%s580] sm:$0x3] %vm592, 0.0
        $region108: #{combined_loss_with_deep_supervision.1} parent=95 // pred_fallthru
          _
        %v594 = vld [vmem:[%s522] sm:$0xff]
        %v595 = vld [vmem:[%s522 + $0x8] sm:$0xff]
        %v596 = vld [vmem:[%s522 + $0x10] sm:$0xff]
        %v597 = vld [vmem:[%s522 + $0x18] sm:$0xff]
        %v598 = vld [vmem:[%s522 + $0x20] sm:$0xff]
        %v599 = vld [vmem:[%s522 + $0x28] sm:$0xff]
        %v600 = vld [vmem:[%s522 + $0x30] sm:$0xff]
        %v601 = vld [vmem:[%s522 + $0x38] sm:$0xff]
        %v602 = vld [vmem:[%s522 + $0x40] sm:$0xff]
        %v603 = vld [vmem:[%s522 + $0x48] sm:$0xff]
        %v604 = vld [vmem:[%s522 + $0x50] sm:$0xff]
        %v605 = vld [vmem:[%s522 + $0x58] sm:$0xff]
        %v606 = vld [vmem:[%s522 + $0x60] sm:$0xff]
        %v607 = vld [vmem:[%s522 + $0x68] sm:$0xff]
        %v608 = vld [vmem:[%s522 + $0x70] sm:$0xff]
        %v609 = vld [vmem:[%s522 + $0x78] sm:$0xff]
        %v610 = vld [vmem:[%s522 + $0x80] sm:$0xff]
        %v611 = vld [vmem:[%s522 + $0x88] sm:$0xff]
        %v612 = vld [vmem:[%s522 + $0x90] sm:$0xff]
        %v613 = vld [vmem:[%s522 + $0x98] sm:$0xff]
        %v614 = vld [vmem:[%s522 + $0xa0] sm:$0xff]
        %v615 = vld [vmem:[%s522 + $0xa8] sm:$0xff]
        %v616 = vld [vmem:[%s522 + $0xb0] sm:$0xff]
        %v617 = vld [vmem:[%s522 + $0xb8] sm:$0xff]
        %v618 = vld [vmem:[%s522 + $0xc0] sm:$0xff]
        %v619 = vld [vmem:[%s522 + $0xc8] sm:$0xff]
        %v620 = vld [vmem:[%s522 + $0xd0] sm:$0xff]
        %v621 = vld [vmem:[%s522 + $0xd8] sm:$0xff]
        %v622 = vld [vmem:[%s522 + $0xe0] sm:$0xff]
        %v623 = vld [vmem:[%s522 + $0xe8] sm:$0xff]
        %v624 = vld [vmem:[%s522 + $0xf0] sm:$0xff]
        %v625 = vld [vmem:[%s522 + $0xf8] sm:$0xff]
        %v626 = vld [vmem:[%s522 + $0x100] sm:$0xff]
        %v627 = vld [vmem:[%s522 + $0x108] sm:$0xff]
        %v628 = vld [vmem:[%s522 + $0x110] sm:$0xff]
        %v629 = vld [vmem:[%s522 + $0x118] sm:$0xff]
        %v630 = vld [vmem:[%s522 + $0x120] sm:$0xff]
        %v631 = vld [vmem:[%s522 + $0x128] sm:$0xff]
        %v632 = vld [vmem:[%s522 + $0x130] sm:$0xff]
        %v633 = vld [vmem:[%s522 + $0x138] sm:$0xff]
        %v634 = vld [vmem:[%s522 + $0x140] sm:$0xff]
        %v635 = vld [vmem:[%s522 + $0x148] sm:$0xff]
        %v636 = vld [vmem:[%s522 + $0x150] sm:$0xff]
        %v637 = vld [vmem:[%s522 + $0x158] sm:$0xff]
        %v638 = vld [vmem:[%s522 + $0x160] sm:$0xff]
        %v639 = vld [vmem:[%s522 + $0x168] sm:$0xff]
        %v640 = vld [vmem:[%s522 + $0x170] sm:$0xff]
        %v641 = vld [vmem:[%s522 + $0x178] sm:$0xff]
        %v642 = vld [vmem:[%s529] sm:$0xff]
        %v643 = vld [vmem:[%s529 + $0x8] sm:$0xff]
        %v644 = vld [vmem:[%s529 + $0x10] sm:$0xff]
        %v645 = vld [vmem:[%s529 + $0x18] sm:$0xff]
        %v646 = vld [vmem:[%s529 + $0x20] sm:$0xff]
        %v647 = vld [vmem:[%s529 + $0x28] sm:$0xff]
        %v648 = vld [vmem:[%s529 + $0x30] sm:$0xff]
        %v649 = vld [vmem:[%s529 + $0x38] sm:$0xff]
        %v650 = vld [vmem:[%s529 + $0x40] sm:$0xff]
        %v651 = vld [vmem:[%s529 + $0x48] sm:$0xff]
        %v652 = vld [vmem:[%s529 + $0x50] sm:$0xff]
        %v653 = vld [vmem:[%s529 + $0x58] sm:$0xff]
        %v654 = vld [vmem:[%s529 + $0x60] sm:$0xff]
        %v655 = vld [vmem:[%s529 + $0x68] sm:$0xff]
        %v656 = vld [vmem:[%s529 + $0x70] sm:$0xff]
        %v657 = vld [vmem:[%s529 + $0x78] sm:$0xff]
        %v658 = vmax.f32 %v594, %v596
        %v659 = vmax.f32 %v595, %v597
        %v660 = vmax.f32 %v602, %v604
        %v661 = vmax.f32 %v603, %v605
        %v662 = vmax.f32 %v610, %v612
        %v663 = vmax.f32 %v611, %v613
        %v664 = vmax.f32 %v618, %v620
        %v665 = vmax.f32 %v619, %v621
        %v666 = vmax.f32 %v626, %v628
        %v667 = vmax.f32 %v627, %v629
        %v668 = vmax.f32 %v634, %v636
        %v669 = vmax.f32 %v635, %v637
        %v670 = vmax.f32 %v658, %v598
        %v671 = vmax.f32 %v659, %v599
        %v672 = vmax.f32 %v660, %v606
        %v673 = vmax.f32 %v661, %v607
        %v674 = vmax.f32 %v662, %v614
        %v675 = vmax.f32 %v663, %v615
        %v676 = vmax.f32 %v664, %v622
        %v677 = vmax.f32 %v665, %v623
        %v678 = vmax.f32 %v666, %v630
        %v679 = vmax.f32 %v667, %v631
        %v680 = vmax.f32 %v668, %v638
        %v681 = vmax.f32 %v669, %v639
        %v682 = vmax.f32 %v670, %v600
        %v683 = vmax.f32 %v671, %v601
        %v684 = vmax.f32 %v672, %v608
        %v685 = vmax.f32 %v673, %v609
        %v686 = vmax.f32 %v674, %v616
        %v687 = vmax.f32 %v675, %v617
        %v688 = vmax.f32 %v676, %v624
        %v689 = vmax.f32 %v677, %v625
        %v690 = vmax.f32 %v678, %v632
        %v691 = vmax.f32 %v679, %v633
        %v692 = vmax.f32 %v680, %v640
        %v693 = vmax.f32 %v681, %v641
        %v694 = vsub.f32 %v594, %v682
        %v695 = vsub.f32 %v595, %v683
        %v696 = vsub.f32 %v596, %v682
        %v697 = vsub.f32 %v597, %v683
        %v698 = vsub.f32 %v598, %v682
        %v699 = vsub.f32 %v599, %v683
        %v700 = vsub.f32 %v600, %v682
        %v701 = vsub.f32 %v601, %v683
        %v702 = vsub.f32 %v602, %v684
        %v703 = vsub.f32 %v603, %v685
        %v704 = vsub.f32 %v604, %v684
        %v705 = vsub.f32 %v605, %v685
        %v706 = vsub.f32 %v606, %v684
        %v707 = vsub.f32 %v607, %v685
        %v708 = vsub.f32 %v608, %v684
        %v709 = vsub.f32 %v609, %v685
        %v710 = vsub.f32 %v610, %v686
        %v711 = vsub.f32 %v611, %v687
        %v712 = vsub.f32 %v612, %v686
        %v713 = vsub.f32 %v613, %v687
        %v714 = vsub.f32 %v614, %v686
        %v715 = vsub.f32 %v615, %v687
        %v716 = vsub.f32 %v616, %v686
        %v717 = vsub.f32 %v617, %v687
        %v718 = vsub.f32 %v618, %v688
        %v719 = vsub.f32 %v619, %v689
        %v720 = vsub.f32 %v620, %v688
        %v721 = vsub.f32 %v621, %v689
        %v722 = vsub.f32 %v622, %v688
        %v723 = vsub.f32 %v623, %v689
        %v724 = vsub.f32 %v624, %v688
        %v725 = vsub.f32 %v625, %v689
        %v726 = vsub.f32 %v626, %v690
        %v727 = vsub.f32 %v627, %v691
        %v728 = vsub.f32 %v628, %v690
        %v729 = vsub.f32 %v629, %v691
        %v730 = vsub.f32 %v630, %v690
        %v731 = vsub.f32 %v631, %v691
        %v732 = vsub.f32 %v632, %v690
        %v733 = vsub.f32 %v633, %v691
        %v734 = vsub.f32 %v634, %v692
        %v735 = vsub.f32 %v635, %v693
        %v736 = vsub.f32 %v636, %v692
        %v737 = vsub.f32 %v637, %v693
        %v738 = vsub.f32 %v638, %v692
        %v739 = vsub.f32 %v639, %v693
        %v740 = vsub.f32 %v640, %v692
        %v741 = vsub.f32 %v641, %v693
        %v742 = vmul.f32 %v694, 1.442695
        %v743 = vpow.pop %v742
        %v744 = vmul.f32 %v695, 1.442695
        %v745 = vpow.pop %v744
        %v746 = vmul.f32 %v696, 1.442695
        %v747 = vpow.pop %v746
        %v748 = vmul.f32 %v697, 1.442695
        %v749 = vpow.pop %v748
        %v750 = vmul.f32 %v698, 1.442695
        %v751 = vpow.pop %v750
        %v752 = vmul.f32 %v699, 1.442695
        %v753 = vpow.pop %v752
        %v754 = vmul.f32 %v700, 1.442695
        %v755 = vpow.pop %v754
        %v756 = vmul.f32 %v701, 1.442695
        %v757 = vpow.pop %v756
        %v758 = vmul.f32 %v702, 1.442695
        %v759 = vpow.pop %v758
        %v760 = vmul.f32 %v703, 1.442695
        %v761 = vpow.pop %v760
        %v762 = vmul.f32 %v704, 1.442695
        %v763 = vpow.pop %v762
        %v764 = vmul.f32 %v705, 1.442695
        %v765 = vpow.pop %v764
        %v766 = vmul.f32 %v706, 1.442695
        %v767 = vpow.pop %v766
        %v768 = vmul.f32 %v707, 1.442695
        %v769 = vpow.pop %v768
        %v770 = vmul.f32 %v708, 1.442695
        %v771 = vpow.pop %v770
        %v772 = vmul.f32 %v709, 1.442695
        %v773 = vpow.pop %v772
        %v774 = vmul.f32 %v710, 1.442695
        %v775 = vpow.pop %v774
        %v776 = vmul.f32 %v711, 1.442695
        %v777 = vpow.pop %v776
        %v778 = vmul.f32 %v712, 1.442695
        %v779 = vpow.pop %v778
        %v780 = vmul.f32 %v713, 1.442695
        %v781 = vpow.pop %v780
        %v782 = vmul.f32 %v714, 1.442695
        %v783 = vpow.pop %v782
        %v784 = vmul.f32 %v715, 1.442695
        %v785 = vpow.pop %v784
        %v786 = vmul.f32 %v716, 1.442695
        %v787 = vpow.pop %v786
        %v788 = vmul.f32 %v717, 1.442695
        %v789 = vpow.pop %v788
        %v790 = vmul.f32 %v718, 1.442695
        %v791 = vpow.pop %v790
        %v792 = vmul.f32 %v719, 1.442695
        %v793 = vpow.pop %v792
        %v794 = vmul.f32 %v720, 1.442695
        %v795 = vpow.pop %v794
        %v796 = vmul.f32 %v721, 1.442695
        %v797 = vpow.pop %v796
        %v798 = vmul.f32 %v722, 1.442695
        %v799 = vpow.pop %v798
        %v800 = vmul.f32 %v723, 1.442695
        %v801 = vpow.pop %v800
        %v802 = vmul.f32 %v724, 1.442695
        %v803 = vpow.pop %v802
        %v804 = vmul.f32 %v725, 1.442695
        %v805 = vpow.pop %v804
        %v806 = vmul.f32 %v726, 1.442695
        %v807 = vpow.pop %v806
        %v808 = vmul.f32 %v727, 1.442695
        %v809 = vpow.pop %v808
        %v810 = vmul.f32 %v728, 1.442695
        %v811 = vpow.pop %v810
        %v812 = vmul.f32 %v729, 1.442695
        %v813 = vpow.pop %v812
        %v814 = vmul.f32 %v730, 1.442695
        %v815 = vpow.pop %v814
        %v816 = vmul.f32 %v731, 1.442695
        %v817 = vpow.pop %v816
        %v818 = vmul.f32 %v732, 1.442695
        %v819 = vpow.pop %v818
        %v820 = vmul.f32 %v733, 1.442695
        %v821 = vpow.pop %v820
        %v822 = vmul.f32 %v734, 1.442695
        %v823 = vpow.pop %v822
        %v824 = vmul.f32 %v735, 1.442695
        %v825 = vpow.pop %v824
        %v826 = vmul.f32 %v736, 1.442695
        %v827 = vpow.pop %v826
        %v828 = vmul.f32 %v737, 1.442695
        %v829 = vpow.pop %v828
        %v830 = vmul.f32 %v738, 1.442695
        %v831 = vpow.pop %v830
        %v832 = vmul.f32 %v739, 1.442695
        %v833 = vpow.pop %v832
        %v834 = vmul.f32 %v740, 1.442695
        %v835 = vpow.pop %v834
        %v836 = vmul.f32 %v741, 1.442695
        %v837 = vpow.pop %v836
        %v838 = vadd.f32 %v743, %v747
        %v839 = vadd.f32 %v745, %v749
        %v840 = vadd.f32 %v759, %v763
        %v841 = vadd.f32 %v761, %v765
        %v842 = vadd.f32 %v775, %v779
        %v843 = vadd.f32 %v777, %v781
        %v844 = vadd.f32 %v791, %v795
        %v845 = vadd.f32 %v793, %v797
        %v846 = vadd.f32 %v807, %v811
        %v847 = vadd.f32 %v809, %v813
        %v848 = vadd.f32 %v823, %v827
        %v849 = vadd.f32 %v825, %v829
        %v850 = vadd.f32 %v838, %v751
        %v851 = vadd.f32 %v839, %v753
        %v852 = vadd.f32 %v840, %v767
        %v853 = vadd.f32 %v841, %v769
        %v854 = vadd.f32 %v842, %v783
        %v855 = vadd.f32 %v843, %v785
        %v856 = vadd.f32 %v844, %v799
        %v857 = vadd.f32 %v845, %v801
        %v858 = vadd.f32 %v846, %v815
        %v859 = vadd.f32 %v847, %v817
        %v860 = vadd.f32 %v848, %v831
        %v861 = vadd.f32 %v849, %v833
        %v862 = vadd.f32 %v850, %v755
        %v863 = vadd.f32 %v851, %v757
        %v864 = vadd.f32 %v852, %v771
        %v865 = vadd.f32 %v853, %v773
        %v866 = vadd.f32 %v854, %v787
        %v867 = vadd.f32 %v855, %v789
        %v868 = vadd.f32 %v856, %v803
        %v869 = vadd.f32 %v857, %v805
        %v870 = vadd.f32 %v858, %v819
        %v871 = vadd.f32 %v859, %v821
        %v872 = vadd.f32 %v860, %v835
        %v873 = vadd.f32 %v861, %v837
        %v874 = vrcp.pop %v862
        %v875 = vrcp.pop %v863
        %v876 = vrcp.pop %v864
        %v877 = vrcp.pop %v865
        %v878 = vrcp.pop %v866
        %v879 = vrcp.pop %v867
        %v880 = vrcp.pop %v868
        %v881 = vrcp.pop %v869
        %v882 = vrcp.pop %v870
        %v883 = vrcp.pop %v871
        %v884 = vrcp.pop %v872
        %v885 = vrcp.pop %v873
        %v886 = vmul.f32 %v743, %v874
        %v887 = vmul.f32 %v745, %v875
        %v888 = vmul.f32 %v747, %v874
        %v889 = vmul.f32 %v749, %v875
        %v890 = vmul.f32 %v751, %v874
        %v891 = vmul.f32 %v753, %v875
        %v892 = vmul.f32 %v755, %v874
        %v893 = vmul.f32 %v757, %v875
        %v894 = vmul.f32 %v759, %v876
        %v895 = vmul.f32 %v761, %v877
        %v896 = vmul.f32 %v763, %v876
        %v897 = vmul.f32 %v765, %v877
        %v898 = vmul.f32 %v767, %v876
        %v899 = vmul.f32 %v769, %v877
        %v900 = vmul.f32 %v771, %v876
        %v901 = vmul.f32 %v773, %v877
        %v902 = vmul.f32 %v775, %v878
        %v903 = vmul.f32 %v777, %v879
        %v904 = vmul.f32 %v779, %v878
        %v905 = vmul.f32 %v781, %v879
        %v906 = vmul.f32 %v783, %v878
        %v907 = vmul.f32 %v785, %v879
        %v908 = vmul.f32 %v787, %v878
        %v909 = vmul.f32 %v789, %v879
        %v910 = vmul.f32 %v791, %v880
        %v911 = vmul.f32 %v793, %v881
        %v912 = vmul.f32 %v795, %v880
        %v913 = vmul.f32 %v797, %v881
        %v914 = vmul.f32 %v799, %v880
        %v915 = vmul.f32 %v801, %v881
        %v916 = vmul.f32 %v803, %v880
        %v917 = vmul.f32 %v805, %v881
        %v918 = vmul.f32 %v807, %v882
        %v919 = vmul.f32 %v809, %v883
        %v920 = vmul.f32 %v811, %v882
        %v921 = vmul.f32 %v813, %v883
        %v922 = vmul.f32 %v815, %v882
        %v923 = vmul.f32 %v817, %v883
        %v924 = vmul.f32 %v819, %v882
        %v925 = vmul.f32 %v821, %v883
        %v926 = vmul.f32 %v823, %v884
        %v927 = vmul.f32 %v825, %v885
        %v928 = vmul.f32 %v827, %v884
        %v929 = vmul.f32 %v829, %v885
        %v930 = vmul.f32 %v831, %v884
        %v931 = vmul.f32 %v833, %v885
        %v932 = vmul.f32 %v835, %v884
        %v933 = vmul.f32 %v837, %v885
        %v934 = vmul.f32 %v594, %v642
        %v935 = vmul.f32 %v595, %v643
        %v936 = vmul.f32 %v602, %v642
        %v937 = vmul.f32 %v603, %v643
        %v938 = vmul.f32 %v610, %v642
        %v939 = vmul.f32 %v611, %v643
        %v940 = vmul.f32 %v618, %v650
        %v941 = vmul.f32 %v619, %v651
        %v942 = vmul.f32 %v626, %v650
        %v943 = vmul.f32 %v627, %v651
        %v944 = vmul.f32 %v634, %v650
        %v945 = vmul.f32 %v635, %v651
        %v946 = vmul.f32 %v596, %v644
        %v947 = vmul.f32 %v597, %v645
        %v948 = vmul.f32 %v604, %v644
        %v949 = vmul.f32 %v605, %v645
        %v950 = vmul.f32 %v612, %v644
        %v951 = vmul.f32 %v613, %v645
        %v952 = vmul.f32 %v620, %v652
        %v953 = vmul.f32 %v621, %v653
        %v954 = vmul.f32 %v628, %v652
        %v955 = vmul.f32 %v629, %v653
        %v956 = vmul.f32 %v636, %v652
        %v957 = vmul.f32 %v637, %v653
        %v958 = vadd.f32 %v934, %v946
        %v959 = vadd.f32 %v935, %v947
        %v960 = vadd.f32 %v936, %v948
        %v961 = vadd.f32 %v937, %v949
        %v962 = vadd.f32 %v938, %v950
        %v963 = vadd.f32 %v939, %v951
        %v964 = vadd.f32 %v940, %v952
        %v965 = vadd.f32 %v941, %v953
        %v966 = vadd.f32 %v942, %v954
        %v967 = vadd.f32 %v943, %v955
        %v968 = vadd.f32 %v944, %v956
        %v969 = vadd.f32 %v945, %v957
        %v970 = vmul.f32 %v598, %v646
        %v971 = vmul.f32 %v599, %v647
        %v972 = vmul.f32 %v606, %v646
        %v973 = vmul.f32 %v607, %v647
        %v974 = vmul.f32 %v614, %v646
        %v975 = vmul.f32 %v615, %v647
        %v976 = vmul.f32 %v622, %v654
        %v977 = vmul.f32 %v623, %v655
        %v978 = vmul.f32 %v630, %v654
        %v979 = vmul.f32 %v631, %v655
        %v980 = vmul.f32 %v638, %v654
        %v981 = vmul.f32 %v639, %v655
        %v982 = vadd.f32 %v958, %v970
        %v983 = vadd.f32 %v959, %v971
        %v984 = vadd.f32 %v960, %v972
        %v985 = vadd.f32 %v961, %v973
        %v986 = vadd.f32 %v962, %v974
        %v987 = vadd.f32 %v963, %v975
        %v988 = vadd.f32 %v964, %v976
        %v989 = vadd.f32 %v965, %v977
        %v990 = vadd.f32 %v966, %v978
        %v991 = vadd.f32 %v967, %v979
        %v992 = vadd.f32 %v968, %v980
        %v993 = vadd.f32 %v969, %v981
        %v994 = vmul.f32 %v600, %v648
        %v995 = vmul.f32 %v601, %v649
        %v996 = vmul.f32 %v608, %v648
        %v997 = vmul.f32 %v609, %v649
        %v998 = vmul.f32 %v616, %v648
        %v999 = vmul.f32 %v617, %v649
        %v1000 = vmul.f32 %v624, %v656
        %v1001 = vmul.f32 %v625, %v657
        %v1002 = vmul.f32 %v632, %v656
        %v1003 = vmul.f32 %v633, %v657
        %v1004 = vmul.f32 %v640, %v656
        %v1005 = vmul.f32 %v641, %v657
        %v1006 = vadd.f32 %v982, %v994
        %v1007 = vadd.f32 %v983, %v995
        %v1008 = vadd.f32 %v984, %v996
        %v1009 = vadd.f32 %v985, %v997
        %v1010 = vadd.f32 %v986, %v998
        %v1011 = vadd.f32 %v987, %v999
        %v1012 = vadd.f32 %v988, %v1000
        %v1013 = vadd.f32 %v989, %v1001
        %v1014 = vadd.f32 %v990, %v1002
        %v1015 = vadd.f32 %v991, %v1003
        %v1016 = vadd.f32 %v992, %v1004
        %v1017 = vadd.f32 %v993, %v1005
        %v1018 = vlog2.pop %v862
        %v1019 = vmul.f32 %v1018, 0.6931472
        %v1020 = vlog2.pop %v863
        %v1021 = vmul.f32 %v1020, 0.6931472
        %v1022 = vlog2.pop %v864
        %v1023 = vmul.f32 %v1022, 0.6931472
        %v1024 = vlog2.pop %v865
        %v1025 = vmul.f32 %v1024, 0.6931472
        %v1026 = vlog2.pop %v866
        %v1027 = vmul.f32 %v1026, 0.6931472
        %v1028 = vlog2.pop %v867
        %v1029 = vmul.f32 %v1028, 0.6931472
        %v1030 = vlog2.pop %v868
        %v1031 = vmul.f32 %v1030, 0.6931472
        %v1032 = vlog2.pop %v869
        %v1033 = vmul.f32 %v1032, 0.6931472
        %v1034 = vlog2.pop %v870
        %v1035 = vmul.f32 %v1034, 0.6931472
        %v1036 = vlog2.pop %v871
        %v1037 = vmul.f32 %v1036, 0.6931472
        %v1038 = vlog2.pop %v872
        %v1039 = vmul.f32 %v1038, 0.6931472
        %v1040 = vlog2.pop %v873
        %v1041 = vmul.f32 %v1040, 0.6931472
        %v1042 = vadd.f32 %v682, %v1019
        %v1043 = vadd.f32 %v683, %v1021
        %v1044 = vadd.f32 %v684, %v1023
        %v1045 = vadd.f32 %v685, %v1025
        %v1046 = vadd.f32 %v686, %v1027
        %v1047 = vadd.f32 %v687, %v1029
        %v1048 = vadd.f32 %v688, %v1031
        %v1049 = vadd.f32 %v689, %v1033
        %v1050 = vadd.f32 %v690, %v1035
        %v1051 = vadd.f32 %v691, %v1037
        %v1052 = vadd.f32 %v692, %v1039
        %v1053 = vadd.f32 %v693, %v1041
        %v1054 = vsub.f32 %v1042, %v1006
        %v1055 = vsub.f32 %v1043, %v1007
        %v1056 = vsub.f32 %v1044, %v1008
        %v1057 = vsub.f32 %v1045, %v1009
        %v1058 = vsub.f32 %v1046, %v1010
        %v1059 = vsub.f32 %v1047, %v1011
        %v1060 = vsub.f32 %v1048, %v1012
        %v1061 = vsub.f32 %v1049, %v1013
        %v1062 = vsub.f32 %v1050, %v1014
        %v1063 = vsub.f32 %v1051, %v1015
        %v1064 = vsub.f32 %v1052, %v1016
        %v1065 = vsub.f32 %v1053, %v1017
        %v1066 = vld [vmem:[%s572] sm:$0x7]
        %v1067 = vld [vmem:[%s572 + $0x4] sm:$0x7]
        %v1068 = vmul.f32 %v886, %v642
        %v1069 = vmul.f32 %v887, %v643
        %v1070 = vmul.f32 %v888, %v644
        %v1071 = vmul.f32 %v889, %v645
        %v1072 = vmul.f32 %v890, %v646
        %v1073 = vmul.f32 %v891, %v647
        %v1074 = vmul.f32 %v892, %v648
        %v1075 = vmul.f32 %v893, %v649
        %v1076 = vmul.f32 %v894, %v642
        %v1077 = vmul.f32 %v895, %v643
        %v1078 = vmul.f32 %v896, %v644
        %v1079 = vmul.f32 %v897, %v645
        %v1080 = vmul.f32 %v898, %v646
        %v1081 = vmul.f32 %v899, %v647
        %v1082 = vmul.f32 %v900, %v648
        %v1083 = vmul.f32 %v901, %v649
        %v1084 = vmul.f32 %v902, %v642
        %v1085 = vmul.f32 %v903, %v643
        %v1086 = vmul.f32 %v904, %v644
        %v1087 = vmul.f32 %v905, %v645
        %v1088 = vmul.f32 %v906, %v646
        %v1089 = vmul.f32 %v907, %v647
        %v1090 = vmul.f32 %v908, %v648
        %v1091 = vmul.f32 %v909, %v649
        %v1092 = vmul.f32 %v910, %v650
        %v1093 = vmul.f32 %v911, %v651
        %v1094 = vmul.f32 %v912, %v652
        %v1095 = vmul.f32 %v913, %v653
        %v1096 = vmul.f32 %v914, %v654
        %v1097 = vmul.f32 %v915, %v655
        %v1098 = vmul.f32 %v916, %v656
        %v1099 = vmul.f32 %v917, %v657
        %v1100 = vmul.f32 %v918, %v650
        %v1101 = vmul.f32 %v919, %v651
        %v1102 = vmul.f32 %v920, %v652
        %v1103 = vmul.f32 %v921, %v653
        %v1104 = vmul.f32 %v922, %v654
        %v1105 = vmul.f32 %v923, %v655
        %v1106 = vmul.f32 %v924, %v656
        %v1107 = vmul.f32 %v925, %v657
        %v1108 = vmul.f32 %v926, %v650
        %v1109 = vmul.f32 %v927, %v651
        %v1110 = vmul.f32 %v928, %v652
        %v1111 = vmul.f32 %v929, %v653
        %v1112 = vmul.f32 %v930, %v654
        %v1113 = vmul.f32 %v931, %v655
        %v1114 = vmul.f32 %v932, %v656
        %v1115 = vmul.f32 %v933, %v657
        %1116 = vadd.xlane.f32.xlu0 %v1068
        %v1117 = vpop.xlane.xlu0 %1116
        %1118 = vadd.xlane.f32.xlu0 %v1069
        %v1119 = vpop.xlane.xlu0 %1118
        %1120 = vadd.xlane.f32.xlu0 %v1070
        %v1121 = vpop.xlane.xlu0 %1120
        %1122 = vadd.xlane.f32.xlu0 %v1071
        %v1123 = vpop.xlane.xlu0 %1122
        %1124 = vadd.xlane.f32.xlu0 %v1072
        %v1125 = vpop.xlane.xlu0 %1124
        %1126 = vadd.xlane.f32.xlu0 %v1073
        %v1127 = vpop.xlane.xlu0 %1126
        %1128 = vadd.xlane.f32.xlu0 %v1074
        %v1129 = vpop.xlane.xlu0 %1128
        %1130 = vadd.xlane.f32.xlu0 %v1075
        %v1131 = vpop.xlane.xlu0 %1130
        %1132 = vadd.xlane.f32.xlu0 %v1076
        %v1133 = vpop.xlane.xlu0 %1132
        %1134 = vadd.xlane.f32.xlu0 %v1077
        %v1135 = vpop.xlane.xlu0 %1134
        %1136 = vadd.xlane.f32.xlu0 %v1078
        %v1137 = vpop.xlane.xlu0 %1136
        %1138 = vadd.xlane.f32.xlu0 %v1079
        %v1139 = vpop.xlane.xlu0 %1138
        %1140 = vadd.xlane.f32.xlu0 %v1080
        %v1141 = vpop.xlane.xlu0 %1140
        %1142 = vadd.xlane.f32.xlu0 %v1081
        %v1143 = vpop.xlane.xlu0 %1142
        %1144 = vadd.xlane.f32.xlu0 %v1082
        %v1145 = vpop.xlane.xlu0 %1144
        %1146 = vadd.xlane.f32.xlu0 %v1083
        %v1147 = vpop.xlane.xlu0 %1146
        %1148 = vadd.xlane.f32.xlu0 %v1084
        %v1149 = vpop.xlane.xlu0 %1148
        %1150 = vadd.xlane.f32.xlu0 %v1085
        %v1151 = vpop.xlane.xlu0 %1150
        %1152 = vadd.xlane.f32.xlu0 %v1086
        %v1153 = vpop.xlane.xlu0 %1152
        %1154 = vadd.xlane.f32.xlu0 %v1087
        %v1155 = vpop.xlane.xlu0 %1154
        %1156 = vadd.xlane.f32.xlu0 %v1088
        %v1157 = vpop.xlane.xlu0 %1156
        %1158 = vadd.xlane.f32.xlu0 %v1089
        %v1159 = vpop.xlane.xlu0 %1158
        %1160 = vadd.xlane.f32.xlu0 %v1090
        %v1161 = vpop.xlane.xlu0 %1160
        %1162 = vadd.xlane.f32.xlu0 %v1091
        %v1163 = vpop.xlane.xlu0 %1162
        %1164 = vadd.xlane.f32.xlu0 %v1092
        %v1165 = vpop.xlane.xlu0 %1164
        %1166 = vadd.xlane.f32.xlu0 %v1093
        %v1167 = vpop.xlane.xlu0 %1166
        %1168 = vadd.xlane.f32.xlu0 %v1094
        %v1169 = vpop.xlane.xlu0 %1168
        %1170 = vadd.xlane.f32.xlu0 %v1095
        %v1171 = vpop.xlane.xlu0 %1170
        %1172 = vadd.xlane.f32.xlu0 %v1096
        %v1173 = vpop.xlane.xlu0 %1172
        %1174 = vadd.xlane.f32.xlu0 %v1097
        %v1175 = vpop.xlane.xlu0 %1174
        %1176 = vadd.xlane.f32.xlu0 %v1098
        %v1177 = vpop.xlane.xlu0 %1176
        %1178 = vadd.xlane.f32.xlu0 %v1099
        %v1179 = vpop.xlane.xlu0 %1178
        %1180 = vadd.xlane.f32.xlu0 %v1100
        %v1181 = vpop.xlane.xlu0 %1180
        %1182 = vadd.xlane.f32.xlu0 %v1101
        %v1183 = vpop.xlane.xlu0 %1182
        %1184 = vadd.xlane.f32.xlu0 %v1102
        %v1185 = vpop.xlane.xlu0 %1184
        %1186 = vadd.xlane.f32.xlu0 %v1103
        %v1187 = vpop.xlane.xlu0 %1186
        %1188 = vadd.xlane.f32.xlu0 %v1104
        %v1189 = vpop.xlane.xlu0 %1188
        %1190 = vadd.xlane.f32.xlu0 %v1105
        %v1191 = vpop.xlane.xlu0 %1190
        %1192 = vadd.xlane.f32.xlu0 %v1106
        %v1193 = vpop.xlane.xlu0 %1192
        %1194 = vadd.xlane.f32.xlu0 %v1107
        %v1195 = vpop.xlane.xlu0 %1194
        %1196 = vadd.xlane.f32.xlu0 %v1108
        %v1197 = vpop.xlane.xlu0 %1196
        %1198 = vadd.xlane.f32.xlu0 %v1109
        %v1199 = vpop.xlane.xlu0 %1198
        %1200 = vadd.xlane.f32.xlu0 %v1110
        %v1201 = vpop.xlane.xlu0 %1200
        %1202 = vadd.xlane.f32.xlu0 %v1111
        %v1203 = vpop.xlane.xlu0 %1202
        %1204 = vadd.xlane.f32.xlu0 %v1112
        %v1205 = vpop.xlane.xlu0 %1204
        %1206 = vadd.xlane.f32.xlu0 %v1113
        %v1207 = vpop.xlane.xlu0 %1206
        %1208 = vadd.xlane.f32.xlu0 %v1114
        %v1209 = vpop.xlane.xlu0 %1208
        %1210 = vadd.xlane.f32.xlu0 %v1115
        %v1211 = vpop.xlane.xlu0 %1210
        %v1260 = vlaneseq
        %v1261 = vand.u32 %v1260, 127
        %v1262 = vperm.slane %v1117, %v1261
        %v1263 = vadd.s32 %v1261, 4294967288
        %v1264 = vperm.slane %v1119, %v1263
        %vm1265 = vcmask 130112
        %v1266 = vsel %vm1265, %v1264, %v1262
        %v1267 = vperm.slane %v1121, %v1261
        %v1268 = vperm.slane %v1123, %v1263
        %v1269 = vsel %vm1265, %v1268, %v1267
        %v1270 = vperm.slane %v1125, %v1261
        %v1271 = vperm.slane %v1127, %v1263
        %v1272 = vsel %vm1265, %v1271, %v1270
        %v1273 = vperm.slane %v1129, %v1261
        %v1274 = vperm.slane %v1131, %v1263
        %v1275 = vsel %vm1265, %v1274, %v1273
        %v1276 = vperm.slane %v1133, %v1261
        %v1277 = vperm.slane %v1135, %v1263
        %v1278 = vsel %vm1265, %v1277, %v1276
        %v1279 = vperm.slane %v1137, %v1261
        %v1280 = vperm.slane %v1139, %v1263
        %v1281 = vsel %vm1265, %v1280, %v1279
        %v1282 = vperm.slane %v1141, %v1261
        %v1283 = vperm.slane %v1143, %v1263
        %v1284 = vsel %vm1265, %v1283, %v1282
        %v1285 = vperm.slane %v1145, %v1261
        %v1286 = vperm.slane %v1147, %v1263
        %v1287 = vsel %vm1265, %v1286, %v1285
        %v1288 = vperm.slane %v1149, %v1261
        %v1289 = vperm.slane %v1151, %v1263
        %v1290 = vsel %vm1265, %v1289, %v1288
        %v1291 = vperm.slane %v1153, %v1261
        %v1292 = vperm.slane %v1155, %v1263
        %v1293 = vsel %vm1265, %v1292, %v1291
        %v1294 = vperm.slane %v1157, %v1261
        %v1295 = vperm.slane %v1159, %v1263
        %v1296 = vsel %vm1265, %v1295, %v1294
        %v1297 = vperm.slane %v1161, %v1261
        %v1298 = vperm.slane %v1163, %v1263
        %v1299 = vsel %vm1265, %v1298, %v1297
        %v1300 = vperm.slane %v1165, %v1261
        %v1301 = vperm.slane %v1167, %v1263
        %v1302 = vsel %vm1265, %v1301, %v1300
        %v1303 = vperm.slane %v1169, %v1261
        %v1304 = vperm.slane %v1171, %v1263
        %v1305 = vsel %vm1265, %v1304, %v1303
        %v1306 = vperm.slane %v1173, %v1261
        %v1307 = vperm.slane %v1175, %v1263
        %v1308 = vsel %vm1265, %v1307, %v1306
        %v1309 = vperm.slane %v1177, %v1261
        %v1310 = vperm.slane %v1179, %v1263
        %v1311 = vsel %vm1265, %v1310, %v1309
        %v1312 = vperm.slane %v1181, %v1261
        %v1313 = vperm.slane %v1183, %v1263
        %v1314 = vsel %vm1265, %v1313, %v1312
        %v1315 = vperm.slane %v1185, %v1261
        %v1316 = vperm.slane %v1187, %v1263
        %v1317 = vsel %vm1265, %v1316, %v1315
        %v1318 = vperm.slane %v1189, %v1261
        %v1319 = vperm.slane %v1191, %v1263
        %v1320 = vsel %vm1265, %v1319, %v1318
        %v1321 = vperm.slane %v1193, %v1261
        %v1322 = vperm.slane %v1195, %v1263
        %v1323 = vsel %vm1265, %v1322, %v1321
        %v1324 = vperm.slane %v1197, %v1261
        %v1325 = vperm.slane %v1199, %v1263
        %v1326 = vsel %vm1265, %v1325, %v1324
        %v1327 = vperm.slane %v1201, %v1261
        %v1328 = vperm.slane %v1203, %v1263
        %v1329 = vsel %vm1265, %v1328, %v1327
        %v1330 = vperm.slane %v1205, %v1261
        %v1331 = vperm.slane %v1207, %v1263
        %v1332 = vsel %vm1265, %v1331, %v1330
        %v1333 = vperm.slane %v1209, %v1261
        %v1334 = vperm.slane %v1211, %v1263
        %v1335 = vsel %vm1265, %v1334, %v1333
        %vm1336 = vcmask 1041409
        %v1337 = vsel %vm1336, %v1269, %v1266
        %vm1338 = vcmask 1042434
        %v1339 = vsel %vm1338, %v1272, %v1337
        %vm1340 = vcmask 1043459
        %v1341 = vsel %vm1340, %v1275, %v1339
        %v1342 = vsel %vm1336, %v1281, %v1278
        %v1343 = vsel %vm1338, %v1284, %v1342
        %v1344 = vsel %vm1340, %v1287, %v1343
        %v1345 = vsel %vm1336, %v1293, %v1290
        %v1346 = vsel %vm1338, %v1296, %v1345
        %v1347 = vsel %vm1340, %v1299, %v1346
        %v1348 = vsel %vm1336, %v1305, %v1302
        %v1349 = vsel %vm1338, %v1308, %v1348
        %v1350 = vsel %vm1340, %v1311, %v1349
        %v1351 = vsel %vm1336, %v1317, %v1314
        %v1352 = vsel %vm1338, %v1320, %v1351
        %v1353 = vsel %vm1340, %v1323, %v1352
        %v1354 = vsel %vm1336, %v1329, %v1326
        %v1355 = vsel %vm1338, %v1332, %v1354
        %v1356 = vsel %vm1340, %v1335, %v1355
        %vm1363 = vcmask 125952
        %v1364 = vsel %vm1363, %v1341, 0.0
        %1365 = vadd.xlane.f32.xlu0 %v1364
        %v1366 = vpop.xlane.xlu0 %1365
        %v1367 = vsel %vm1363, %v1344, 0.0
        %1368 = vadd.xlane.f32.xlu0 %v1367
        %v1369 = vpop.xlane.xlu0 %1368
        %v1370 = vsel %vm1363, %v1347, 0.0
        %1371 = vadd.xlane.f32.xlu0 %v1370
        %v1372 = vpop.xlane.xlu0 %1371
        %v1373 = vsel %vm1363, %v1350, 0.0
        %1374 = vadd.xlane.f32.xlu0 %v1373
        %v1375 = vpop.xlane.xlu0 %1374
        %v1376 = vsel %vm1363, %v1353, 0.0
        %1377 = vadd.xlane.f32.xlu0 %v1376
        %v1378 = vpop.xlane.xlu0 %1377
        %v1379 = vsel %vm1363, %v1356, 0.0
        %1380 = vadd.xlane.f32.xlu0 %v1379
        %v1381 = vpop.xlane.xlu0 %1380
        %v1388 = vperm.slane %v1366, %v1261
        %v1389 = vperm.slane %v1369, %v1261
        %v1390 = vperm.slane %v1372, %v1261
        %v1391 = vperm.slane %v1375, %v1261
        %v1392 = vperm.slane %v1378, %v1261
        %v1393 = vperm.slane %v1381, %v1261
        %v1394 = vsel %vm1336, %v1389, %v1388
        %v1395 = vsel %vm1338, %v1390, %v1394
        %v1396 = vsel %vm1336, %v1392, %v1391
        %v1397 = vsel %vm1338, %v1393, %v1396
        %v1400 = vadd.f32 %v1066, %v1395
        %v1401 = vadd.f32 %v1067, %v1397
        %vm1402 = vcmask 26624
        %1403 = vst.msk [vmem:[%s572] sm:$0x7] %vm1402, %v1400
        %1404 = vst.msk [vmem:[%s572 + $0x4] sm:$0x7] %vm1402, %v1401
        %s1405 = scalar_lea.vmem %s572, 8
        %v1406 = vld [vmem:[%s1405] sm:$0x7]
        %v1407 = vld [vmem:[%s1405 + $0x4] sm:$0x7]
        %1408 = vadd.xlane.f32.xlu0 %v886
        %v1409 = vpop.xlane.xlu0 %1408
        %1410 = vadd.xlane.f32.xlu0 %v887
        %v1411 = vpop.xlane.xlu0 %1410
        %1412 = vadd.xlane.f32.xlu0 %v888
        %v1413 = vpop.xlane.xlu0 %1412
        %1414 = vadd.xlane.f32.xlu0 %v889
        %v1415 = vpop.xlane.xlu0 %1414
        %1416 = vadd.xlane.f32.xlu0 %v890
        %v1417 = vpop.xlane.xlu0 %1416
        %1418 = vadd.xlane.f32.xlu0 %v891
        %v1419 = vpop.xlane.xlu0 %1418
        %1420 = vadd.xlane.f32.xlu0 %v892
        %v1421 = vpop.xlane.xlu0 %1420
        %1422 = vadd.xlane.f32.xlu0 %v893
        %v1423 = vpop.xlane.xlu0 %1422
        %1424 = vadd.xlane.f32.xlu0 %v894
        %v1425 = vpop.xlane.xlu0 %1424
        %1426 = vadd.xlane.f32.xlu0 %v895
        %v1427 = vpop.xlane.xlu0 %1426
        %1428 = vadd.xlane.f32.xlu0 %v896
        %v1429 = vpop.xlane.xlu0 %1428
        %1430 = vadd.xlane.f32.xlu0 %v897
        %v1431 = vpop.xlane.xlu0 %1430
        %1432 = vadd.xlane.f32.xlu0 %v898
        %v1433 = vpop.xlane.xlu0 %1432
        %1434 = vadd.xlane.f32.xlu0 %v899
        %v1435 = vpop.xlane.xlu0 %1434
        %1436 = vadd.xlane.f32.xlu0 %v900
        %v1437 = vpop.xlane.xlu0 %1436
        %1438 = vadd.xlane.f32.xlu0 %v901
        %v1439 = vpop.xlane.xlu0 %1438
        %1440 = vadd.xlane.f32.xlu0 %v902
        %v1441 = vpop.xlane.xlu0 %1440
        %1442 = vadd.xlane.f32.xlu0 %v903
        %v1443 = vpop.xlane.xlu0 %1442
        %1444 = vadd.xlane.f32.xlu0 %v904
        %v1445 = vpop.xlane.xlu0 %1444
        %1446 = vadd.xlane.f32.xlu0 %v905
        %v1447 = vpop.xlane.xlu0 %1446
        %1448 = vadd.xlane.f32.xlu0 %v906
        %v1449 = vpop.xlane.xlu0 %1448
        %1450 = vadd.xlane.f32.xlu0 %v907
        %v1451 = vpop.xlane.xlu0 %1450
        %1452 = vadd.xlane.f32.xlu0 %v908
        %v1453 = vpop.xlane.xlu0 %1452
        %1454 = vadd.xlane.f32.xlu0 %v909
        %v1455 = vpop.xlane.xlu0 %1454
        %1456 = vadd.xlane.f32.xlu0 %v910
        %v1457 = vpop.xlane.xlu0 %1456
        %1458 = vadd.xlane.f32.xlu0 %v911
        %v1459 = vpop.xlane.xlu0 %1458
        %1460 = vadd.xlane.f32.xlu0 %v912
        %v1461 = vpop.xlane.xlu0 %1460
        %1462 = vadd.xlane.f32.xlu0 %v913
        %v1463 = vpop.xlane.xlu0 %1462
        %1464 = vadd.xlane.f32.xlu0 %v914
        %v1465 = vpop.xlane.xlu0 %1464
        %1466 = vadd.xlane.f32.xlu0 %v915
        %v1467 = vpop.xlane.xlu0 %1466
        %1468 = vadd.xlane.f32.xlu0 %v916
        %v1469 = vpop.xlane.xlu0 %1468
        %1470 = vadd.xlane.f32.xlu0 %v917
        %v1471 = vpop.xlane.xlu0 %1470
        %1472 = vadd.xlane.f32.xlu0 %v918
        %v1473 = vpop.xlane.xlu0 %1472
        %1474 = vadd.xlane.f32.xlu0 %v919
        %v1475 = vpop.xlane.xlu0 %1474
        %1476 = vadd.xlane.f32.xlu0 %v920
        %v1477 = vpop.xlane.xlu0 %1476
        %1478 = vadd.xlane.f32.xlu0 %v921
        %v1479 = vpop.xlane.xlu0 %1478
        %1480 = vadd.xlane.f32.xlu0 %v922
        %v1481 = vpop.xlane.xlu0 %1480
        %1482 = vadd.xlane.f32.xlu0 %v923
        %v1483 = vpop.xlane.xlu0 %1482
        %1484 = vadd.xlane.f32.xlu0 %v924
        %v1485 = vpop.xlane.xlu0 %1484
        %1486 = vadd.xlane.f32.xlu0 %v925
        %v1487 = vpop.xlane.xlu0 %1486
        %1488 = vadd.xlane.f32.xlu0 %v926
        %v1489 = vpop.xlane.xlu0 %1488
        %1490 = vadd.xlane.f32.xlu0 %v927
        %v1491 = vpop.xlane.xlu0 %1490
        %1492 = vadd.xlane.f32.xlu0 %v928
        %v1493 = vpop.xlane.xlu0 %1492
        %1494 = vadd.xlane.f32.xlu0 %v929
        %v1495 = vpop.xlane.xlu0 %1494
        %1496 = vadd.xlane.f32.xlu0 %v930
        %v1497 = vpop.xlane.xlu0 %1496
        %1498 = vadd.xlane.f32.xlu0 %v931
        %v1499 = vpop.xlane.xlu0 %1498
        %1500 = vadd.xlane.f32.xlu0 %v932
        %v1501 = vpop.xlane.xlu0 %1500
        %1502 = vadd.xlane.f32.xlu0 %v933
        %v1503 = vpop.xlane.xlu0 %1502
        %v1552 = vperm.slane %v1409, %v1261
        %v1553 = vperm.slane %v1411, %v1263
        %v1554 = vsel %vm1265, %v1553, %v1552
        %v1555 = vperm.slane %v1413, %v1261
        %v1556 = vperm.slane %v1415, %v1263
        %v1557 = vsel %vm1265, %v1556, %v1555
        %v1558 = vperm.slane %v1417, %v1261
        %v1559 = vperm.slane %v1419, %v1263
        %v1560 = vsel %vm1265, %v1559, %v1558
        %v1561 = vperm.slane %v1421, %v1261
        %v1562 = vperm.slane %v1423, %v1263
        %v1563 = vsel %vm1265, %v1562, %v1561
        %v1564 = vperm.slane %v1425, %v1261
        %v1565 = vperm.slane %v1427, %v1263
        %v1566 = vsel %vm1265, %v1565, %v1564
        %v1567 = vperm.slane %v1429, %v1261
        %v1568 = vperm.slane %v1431, %v1263
        %v1569 = vsel %vm1265, %v1568, %v1567
        %v1570 = vperm.slane %v1433, %v1261
        %v1571 = vperm.slane %v1435, %v1263
        %v1572 = vsel %vm1265, %v1571, %v1570
        %v1573 = vperm.slane %v1437, %v1261
        %v1574 = vperm.slane %v1439, %v1263
        %v1575 = vsel %vm1265, %v1574, %v1573
        %v1576 = vperm.slane %v1441, %v1261
        %v1577 = vperm.slane %v1443, %v1263
        %v1578 = vsel %vm1265, %v1577, %v1576
        %v1579 = vperm.slane %v1445, %v1261
        %v1580 = vperm.slane %v1447, %v1263
        %v1581 = vsel %vm1265, %v1580, %v1579
        %v1582 = vperm.slane %v1449, %v1261
        %v1583 = vperm.slane %v1451, %v1263
        %v1584 = vsel %vm1265, %v1583, %v1582
        %v1585 = vperm.slane %v1453, %v1261
        %v1586 = vperm.slane %v1455, %v1263
        %v1587 = vsel %vm1265, %v1586, %v1585
        %v1588 = vperm.slane %v1457, %v1261
        %v1589 = vperm.slane %v1459, %v1263
        %v1590 = vsel %vm1265, %v1589, %v1588
        %v1591 = vperm.slane %v1461, %v1261
        %v1592 = vperm.slane %v1463, %v1263
        %v1593 = vsel %vm1265, %v1592, %v1591
        %v1594 = vperm.slane %v1465, %v1261
        %v1595 = vperm.slane %v1467, %v1263
        %v1596 = vsel %vm1265, %v1595, %v1594
        %v1597 = vperm.slane %v1469, %v1261
        %v1598 = vperm.slane %v1471, %v1263
        %v1599 = vsel %vm1265, %v1598, %v1597
        %v1600 = vperm.slane %v1473, %v1261
        %v1601 = vperm.slane %v1475, %v1263
        %v1602 = vsel %vm1265, %v1601, %v1600
        %v1603 = vperm.slane %v1477, %v1261
        %v1604 = vperm.slane %v1479, %v1263
        %v1605 = vsel %vm1265, %v1604, %v1603
        %v1606 = vperm.slane %v1481, %v1261
        %v1607 = vperm.slane %v1483, %v1263
        %v1608 = vsel %vm1265, %v1607, %v1606
        %v1609 = vperm.slane %v1485, %v1261
        %v1610 = vperm.slane %v1487, %v1263
        %v1611 = vsel %vm1265, %v1610, %v1609
        %v1612 = vperm.slane %v1489, %v1261
        %v1613 = vperm.slane %v1491, %v1263
        %v1614 = vsel %vm1265, %v1613, %v1612
        %v1615 = vperm.slane %v1493, %v1261
        %v1616 = vperm.slane %v1495, %v1263
        %v1617 = vsel %vm1265, %v1616, %v1615
        %v1618 = vperm.slane %v1497, %v1261
        %v1619 = vperm.slane %v1499, %v1263
        %v1620 = vsel %vm1265, %v1619, %v1618
        %v1621 = vperm.slane %v1501, %v1261
        %v1622 = vperm.slane %v1503, %v1263
        %v1623 = vsel %vm1265, %v1622, %v1621
        %v1624 = vsel %vm1336, %v1557, %v1554
        %v1625 = vsel %vm1338, %v1560, %v1624
        %v1626 = vsel %vm1340, %v1563, %v1625
        %v1627 = vsel %vm1336, %v1569, %v1566
        %v1628 = vsel %vm1338, %v1572, %v1627
        %v1629 = vsel %vm1340, %v1575, %v1628
        %v1630 = vsel %vm1336, %v1581, %v1578
        %v1631 = vsel %vm1338, %v1584, %v1630
        %v1632 = vsel %vm1340, %v1587, %v1631
        %v1633 = vsel %vm1336, %v1593, %v1590
        %v1634 = vsel %vm1338, %v1596, %v1633
        %v1635 = vsel %vm1340, %v1599, %v1634
        %v1636 = vsel %vm1336, %v1605, %v1602
        %v1637 = vsel %vm1338, %v1608, %v1636
        %v1638 = vsel %vm1340, %v1611, %v1637
        %v1639 = vsel %vm1336, %v1617, %v1614
        %v1640 = vsel %vm1338, %v1620, %v1639
        %v1641 = vsel %vm1340, %v1623, %v1640
        %v1648 = vsel %vm1363, %v1626, 0.0
        %1649 = vadd.xlane.f32.xlu0 %v1648
        %v1650 = vpop.xlane.xlu0 %1649
        %v1651 = vsel %vm1363, %v1629, 0.0
        %1652 = vadd.xlane.f32.xlu0 %v1651
        %v1653 = vpop.xlane.xlu0 %1652
        %v1654 = vsel %vm1363, %v1632, 0.0
        %1655 = vadd.xlane.f32.xlu0 %v1654
        %v1656 = vpop.xlane.xlu0 %1655
        %v1657 = vsel %vm1363, %v1635, 0.0
        %1658 = vadd.xlane.f32.xlu0 %v1657
        %v1659 = vpop.xlane.xlu0 %1658
        %v1660 = vsel %vm1363, %v1638, 0.0
        %1661 = vadd.xlane.f32.xlu0 %v1660
        %v1662 = vpop.xlane.xlu0 %1661
        %v1663 = vsel %vm1363, %v1641, 0.0
        %1664 = vadd.xlane.f32.xlu0 %v1663
        %v1665 = vpop.xlane.xlu0 %1664
        %v1672 = vperm.slane %v1650, %v1261
        %v1673 = vperm.slane %v1653, %v1261
        %v1674 = vperm.slane %v1656, %v1261
        %v1675 = vperm.slane %v1659, %v1261
        %v1676 = vperm.slane %v1662, %v1261
        %v1677 = vperm.slane %v1665, %v1261
        %v1678 = vsel %vm1336, %v1673, %v1672
        %v1679 = vsel %vm1338, %v1674, %v1678
        %v1680 = vsel %vm1336, %v1676, %v1675
        %v1681 = vsel %vm1338, %v1677, %v1680
        %v1684 = vadd.f32 %v1406, %v1679
        %v1685 = vadd.f32 %v1407, %v1681
        %1686 = vst.msk [vmem:[%s1405] sm:$0x7] %vm1402, %v1684
        %1687 = vst.msk [vmem:[%s1405 + $0x4] sm:$0x7] %vm1402, %v1685
        %v1688 = vld [vmem:[%s576] sm:$0x3]
        %1689 = vadd.xlane.f32.xlu0 %v642
        %v1690 = vpop.xlane.xlu0 %1689
        %1691 = vadd.xlane.f32.xlu0 %v643
        %v1692 = vpop.xlane.xlu0 %1691
        %1693 = vadd.xlane.f32.xlu0 %v644
        %v1694 = vpop.xlane.xlu0 %1693
        %1695 = vadd.xlane.f32.xlu0 %v645
        %v1696 = vpop.xlane.xlu0 %1695
        %1697 = vadd.xlane.f32.xlu0 %v646
        %v1698 = vpop.xlane.xlu0 %1697
        %1699 = vadd.xlane.f32.xlu0 %v647
        %v1700 = vpop.xlane.xlu0 %1699
        %1701 = vadd.xlane.f32.xlu0 %v648
        %v1702 = vpop.xlane.xlu0 %1701
        %1703 = vadd.xlane.f32.xlu0 %v649
        %v1704 = vpop.xlane.xlu0 %1703
        %1705 = vadd.xlane.f32.xlu0 %v650
        %v1706 = vpop.xlane.xlu0 %1705
        %1707 = vadd.xlane.f32.xlu0 %v651
        %v1708 = vpop.xlane.xlu0 %1707
        %1709 = vadd.xlane.f32.xlu0 %v652
        %v1710 = vpop.xlane.xlu0 %1709
        %1711 = vadd.xlane.f32.xlu0 %v653
        %v1712 = vpop.xlane.xlu0 %1711
        %1713 = vadd.xlane.f32.xlu0 %v654
        %v1714 = vpop.xlane.xlu0 %1713
        %1715 = vadd.xlane.f32.xlu0 %v655
        %v1716 = vpop.xlane.xlu0 %1715
        %1717 = vadd.xlane.f32.xlu0 %v656
        %v1718 = vpop.xlane.xlu0 %1717
        %1719 = vadd.xlane.f32.xlu0 %v657
        %v1720 = vpop.xlane.xlu0 %1719
        %v1737 = vperm.slane %v1690, %v1261
        %v1738 = vperm.slane %v1692, %v1263
        %v1739 = vsel %vm1265, %v1738, %v1737
        %v1740 = vperm.slane %v1694, %v1261
        %v1741 = vperm.slane %v1696, %v1263
        %v1742 = vsel %vm1265, %v1741, %v1740
        %v1743 = vperm.slane %v1698, %v1261
        %v1744 = vperm.slane %v1700, %v1263
        %v1745 = vsel %vm1265, %v1744, %v1743
        %v1746 = vperm.slane %v1702, %v1261
        %v1747 = vperm.slane %v1704, %v1263
        %v1748 = vsel %vm1265, %v1747, %v1746
        %v1749 = vperm.slane %v1706, %v1261
        %v1750 = vperm.slane %v1708, %v1263
        %v1751 = vsel %vm1265, %v1750, %v1749
        %v1752 = vperm.slane %v1710, %v1261
        %v1753 = vperm.slane %v1712, %v1263
        %v1754 = vsel %vm1265, %v1753, %v1752
        %v1755 = vperm.slane %v1714, %v1261
        %v1756 = vperm.slane %v1716, %v1263
        %v1757 = vsel %vm1265, %v1756, %v1755
        %v1758 = vperm.slane %v1718, %v1261
        %v1759 = vperm.slane %v1720, %v1263
        %v1760 = vsel %vm1265, %v1759, %v1758
        %v1761 = vsel %vm1336, %v1742, %v1739
        %v1762 = vsel %vm1338, %v1745, %v1761
        %v1763 = vsel %vm1340, %v1748, %v1762
        %v1764 = vsel %vm1336, %v1754, %v1751
        %v1765 = vsel %vm1338, %v1757, %v1764
        %v1766 = vsel %vm1340, %v1760, %v1765
        %v1769 = vsel %vm1363, %v1763, 0.0
        %1770 = vadd.xlane.f32.xlu0 %v1769
        %v1771 = vpop.xlane.xlu0 %1770
        %v1772 = vsel %vm1363, %v1766, 0.0
        %1773 = vadd.xlane.f32.xlu0 %v1772
        %v1774 = vpop.xlane.xlu0 %1773
        %v1777 = vperm.slane %v1771, %v1261
        %v1778 = vperm.slane %v1774, %v1261
        %v1779 = vsel %vm1336, %v1778, %v1777
        %v1781 = vadd.f32 %v1688, %v1779
        %vm1782 = vcmask 25600
        %1783 = vst.msk [vmem:[%s576] sm:$0x3] %vm1782, %v1781
        %v1784 = vld [vmem:[%s580] sm:$0x3]
        %1785 = vadd.xlane.f32.xlu0 %v1054
        %v1786 = vpop.xlane.xlu0 %1785
        %1787 = vadd.xlane.f32.xlu0 %v1055
        %v1788 = vpop.xlane.xlu0 %1787
        %1789 = vadd.xlane.f32.xlu0 %v1056
        %v1790 = vpop.xlane.xlu0 %1789
        %1791 = vadd.xlane.f32.xlu0 %v1057
        %v1792 = vpop.xlane.xlu0 %1791
        %1793 = vadd.xlane.f32.xlu0 %v1058
        %v1794 = vpop.xlane.xlu0 %1793
        %1795 = vadd.xlane.f32.xlu0 %v1059
        %v1796 = vpop.xlane.xlu0 %1795
        %1797 = vadd.xlane.f32.xlu0 %v1060
        %v1798 = vpop.xlane.xlu0 %1797
        %1799 = vadd.xlane.f32.xlu0 %v1061
        %v1800 = vpop.xlane.xlu0 %1799
        %1801 = vadd.xlane.f32.xlu0 %v1062
        %v1802 = vpop.xlane.xlu0 %1801
        %1803 = vadd.xlane.f32.xlu0 %v1063
        %v1804 = vpop.xlane.xlu0 %1803
        %1805 = vadd.xlane.f32.xlu0 %v1064
        %v1806 = vpop.xlane.xlu0 %1805
        %1807 = vadd.xlane.f32.xlu0 %v1065
        %v1808 = vpop.xlane.xlu0 %1807
        %v1821 = vperm.slane %v1786, %v1261
        %v1822 = vperm.slane %v1788, %v1263
        %v1823 = vsel %vm1265, %v1822, %v1821
        %v1824 = vperm.slane %v1790, %v1261
        %v1825 = vperm.slane %v1792, %v1263
        %v1826 = vsel %vm1265, %v1825, %v1824
        %v1827 = vperm.slane %v1794, %v1261
        %v1828 = vperm.slane %v1796, %v1263
        %v1829 = vsel %vm1265, %v1828, %v1827
        %v1830 = vperm.slane %v1798, %v1261
        %v1831 = vperm.slane %v1800, %v1263
        %v1832 = vsel %vm1265, %v1831, %v1830
        %v1833 = vperm.slane %v1802, %v1261
        %v1834 = vperm.slane %v1804, %v1263
        %v1835 = vsel %vm1265, %v1834, %v1833
        %v1836 = vperm.slane %v1806, %v1261
        %v1837 = vperm.slane %v1808, %v1263
        %v1838 = vsel %vm1265, %v1837, %v1836
        %v1839 = vsel %vm1336, %v1826, %v1823
        %v1840 = vsel %vm1338, %v1829, %v1839
        %v1841 = vsel %vm1336, %v1835, %v1832
        %v1842 = vsel %vm1338, %v1838, %v1841
        %vm1845 = vcmask 124928
        %v1846 = vsel %vm1845, %v1840, 0.0
        %1847 = vadd.xlane.f32.xlu0 %v1846
        %v1848 = vpop.xlane.xlu0 %1847
        %v1849 = vsel %vm1845, %v1842, 0.0
        %1850 = vadd.xlane.f32.xlu0 %v1849
        %v1851 = vpop.xlane.xlu0 %1850
        %v1854 = vperm.slane %v1848, %v1261
        %v1855 = vperm.slane %v1851, %v1261
        %v1856 = vsel %vm1336, %v1855, %v1854
        %v1858 = vadd.f32 %v1784, %v1856
        %vm1859 = vcmask 17408
        %1860 = vst.msk [vmem:[%s580] sm:$0x3] %vm1859, %v1858
        %p1861 = scmp.lt.s32.totalorder %s20, 1
        %s1862 = scalar_select %p1861, %s20, 1
        %s1863 = smul.addr %s1862, 4
        %s1864 = smul.addr %s1863, 4
        %s1865 = scalar_lea.vmem %s2, %s1864
        %p1866 = scmp.lt.s32.totalorder %s20, 1
        %s1867 = scalar_select %p1866, %s20, 1
        %s1868 = smul.addr %s1867, 2
        %s1869 = scalar_lea.vmem %s3, %s1868
        %p1870 = scmp.lt.s32.totalorder %s20, 1
        %s1871 = scalar_select %p1870, %s20, 1
        %s1872 = smul.addr %s1871, 2
        %s1873 = scalar_lea.vmem %s4, %s1872
        // Predicated region
        $region109: #{combined_loss_with_deep_supervision.1} parent=95 // pred_check
          %p1874 = pneg %p102
        $region110: #{combined_loss_with_deep_supervision.1} parent=95 // pred_check_branch
          %1876 = sbr.rel (%p1874) target = $region112
        $region111: #{combined_loss_with_deep_supervision.1} parent=95 // pred_region
          _
        $region112: #{combined_loss_with_deep_supervision.1} parent=95 // pred_fallthru
          _
        // Predicated region
        $region113: #{combined_loss_with_deep_supervision.1} parent=95 // pred_check
          %p1877 = pneg %p128
        $region114: #{combined_loss_with_deep_supervision.1} parent=95 // pred_check_branch
          %1879 = sbr.rel (%p1877) target = $region116
        $region115: #{combined_loss_with_deep_supervision.1} parent=95 // pred_region
          _
        $region116: #{combined_loss_with_deep_supervision.1} parent=95 // pred_fallthru
          _
        // Predicated region
        $region117: #{combined_loss_with_deep_supervision.1} parent=95 // pred_check
          %p1880 = pneg %p154
        $region118: #{combined_loss_with_deep_supervision.1} parent=95 // pred_check_branch
          %1882 = sbr.rel (%p1880) target = $region120
        $region119: #{combined_loss_with_deep_supervision.1} parent=95 // pred_region
          _
        $region120: #{combined_loss_with_deep_supervision.1} parent=95 // pred_fallthru
          _
      $region96: #{combined_loss_with_deep_supervision.1} parent=5 // pred_fallthru
        _
      %p1883 = scmp.le.s32.totalorder 2, %s11
      // Predicated region
      $region121: #{combined_loss_with_deep_supervision.1} parent=5 // pred_check
        %p1884 = pneg %p1883
      $region122: #{combined_loss_with_deep_supervision.1} parent=5 // pred_check_branch
        %1886 = sbr.rel (%p1884) target = $region124
      $region123: #{combined_loss_with_deep_supervision.1} parent=5 // pred_region
        %s1887 = ssub.s32 %s11, 2
        // Predicated region
        $region125: #{combined_loss_with_deep_supervision.1} parent=123 // pred_check
          %p1888 = pneg %p108
        $region126: #{combined_loss_with_deep_supervision.1} parent=123 // pred_check_branch
          %1890 = sbr.rel (%p1888) target = $region128
        $region127: #{combined_loss_with_deep_supervision.1} parent=123 // pred_region
          %p1891 = scmp.lt.s32.totalorder %s22, 1
          %s1892 = scalar_select %p1891, %s22, 1
          %s1893 = smul.addr %s1892, 4
          %s1894 = smul.addr %s1893, 4
          %s1895 = scalar_lea.vmem %s2, %s1894
        $region128: #{combined_loss_with_deep_supervision.1} parent=123 // pred_fallthru
          _
        // Predicated region
        $region129: #{combined_loss_with_deep_supervision.1} parent=123 // pred_check
          %p1896 = pneg %p134
        $region130: #{combined_loss_with_deep_supervision.1} parent=123 // pred_check_branch
          %1898 = sbr.rel (%p1896) target = $region132
        $region131: #{combined_loss_with_deep_supervision.1} parent=123 // pred_region
          %p1899 = scmp.lt.s32.totalorder %s22, 1
          %s1900 = scalar_select %p1899, %s22, 1
          %s1901 = smul.addr %s1900, 2
          %s1902 = scalar_lea.vmem %s3, %s1901
        $region132: #{combined_loss_with_deep_supervision.1} parent=123 // pred_fallthru
          _
        // Predicated region
        $region133: #{combined_loss_with_deep_supervision.1} parent=123 // pred_check
          %p1903 = pneg %p160
        $region134: #{combined_loss_with_deep_supervision.1} parent=123 // pred_check_branch
          %1905 = sbr.rel (%p1903) target = $region136
        $region135: #{combined_loss_with_deep_supervision.1} parent=123 // pred_region
          %p1906 = scmp.lt.s32.totalorder %s22, 1
          %s1907 = scalar_select %p1906, %s22, 1
          %s1908 = smul.addr %s1907, 2
          %s1909 = scalar_lea.vmem %s4, %s1908
        $region136: #{combined_loss_with_deep_supervision.1} parent=123 // pred_fallthru
          _
      $region124: #{combined_loss_with_deep_supervision.1} parent=5 // pred_fallthru
        _
    $region6: #{combined_loss_with_deep_supervision.1} parent=1 // loop_footer
      %s15 = sadd.s32 1, %s11
    $region7: #{combined_loss_with_deep_supervision.1} parent=1 // loop_footer_branch
      %10 = sbr.rel target = $region3
    $region8: #{combined_loss_with_deep_supervision.1} parent=1 // loop_exit
      _

</llo_original>
